<compile_context>
chip_gen: v5e
topology: v5e:2x2
jax: 0.10.0
libtpu: 0.0.40
codegen_flags: <defaults>
</compile_context>

<pallas_src>
import functools

import jax
import jax.numpy as jnp
from jax.experimental import pallas as pl
from jax.experimental.pallas import tpu as pltpu


def _round_up(x, m):
    return ((x + m - 1) // m) * m


def _vmem_capacity_bytes():
    """Trace-time VMEM query with a conservative (v7x, 64 MiB) fallback."""
    try:
        info = pltpu.get_tpu_info()
        for attr in ("vmem_capacity_bytes", "vmem_size_bytes", "vmem_bytes"):
            v = getattr(info, attr, None)
            if v:
                return int(v)
    except Exception:
        pass
    return 64 * 1024 * 1024


def _choose_tiling(n):
    """Pick MXU/(8,128)-aligned A_hat tiles sized for the detected VMEM.

    Returns (n_pad, tm, tk, vmem_limit_bytes).
    """
    big_vmem = _vmem_capacity_bytes() >= 100 * 1024 * 1024   # v5e / v6e: 128 MiB
    vmem_limit = (64 if big_vmem else 32) * 1024 * 1024
    if n <= 512:
        n_pad = max(256, _round_up(n, 256))
        return n_pad, n_pad, n_pad, vmem_limit
    n_pad = _round_up(n, 512)
    # v5e/v6e: 1024x2048 bf16 A tile (4 MiB, 8 MiB double-buffered).
    # v7x:      512x2048 bf16 A tile (2 MiB, 4 MiB double-buffered).
    tm = 1024 if (big_vmem and n_pad % 1024 == 0) else 512
    tk = 512
    for cand in (2048, 1024):
        if n_pad % cand == 0:
            tk = cand
            break
    return n_pad, tm, tk, vmem_limit


# ----------------------------------------------------------------------------
# Kernel 1: edge embedding MLP
#   sigmoid( w2 * relu( [src, dst, attr] @ w1 + b1 ) + b2 )  per edge,
# gridded over lane-dense edge tiles (E on the lane axis).
# ----------------------------------------------------------------------------
def _edge_mlp_kernel(params_ref, feat_ref, out_ref):
    # params_ref (SMEM, f32[8]): [w1_0, w1_1, w1_2, b1, w2, b2, pad, pad]
    # feat_ref   (VMEM, f32[3, E_TILE]): rows = [src_idx, dst_idx, edge_attr]
    h = (params_ref[0] * feat_ref[0:1, :]
         + params_ref[1] * feat_ref[1:2, :]
         + params_ref[2] * feat_ref[2:3, :]
         + params_ref[3])
    h = jnp.maximum(h, 0.0)
    out_ref[...] = jax.nn.sigmoid(params_ref[4] * h + params_ref[5])


def edge_embedding_pallas(edge_index_f, edge_attr, edge_params):
    """edge_index_f: f32 (2, E), edge_attr: f32 (E, 1) -> f32 (E,) weights."""
    E = edge_index_f.shape[1]
    e_tile = 4096 if E >= 4096 else max(128, _round_up(E, 128))
    e_pad = _round_up(E, e_tile)
    feat = jnp.concatenate([edge_index_f, edge_attr.T], axis=0)       # (3, E)
    feat = jnp.pad(feat, ((0, 0), (0, e_pad - E)))
    out = pl.pallas_call(
        _edge_mlp_kernel,
        out_shape=jax.ShapeDtypeStruct((1, e_pad), jnp.float32),
        grid=(e_pad // e_tile,),
        in_specs=[
            pl.BlockSpec(memory_space=pltpu.MemorySpace.SMEM),        # 6 scalars
            pl.BlockSpec((3, e_tile), lambda i: (0, i)),
        ],
        out_specs=pl.BlockSpec((1, e_tile), lambda i: (0, i)),
        compiler_params=pltpu.CompilerParams(
            dimension_semantics=("parallel",)),
        cost_estimate=pl.CostEstimate(flops=8 * e_pad,
                                      transcendentals=e_pad,
                                      bytes_accessed=4 * e_pad * 4),
    )(edge_params, feat)
    return out[0, :E]


# ----------------------------------------------------------------------------
# Kernel 2: hoisted feature transform  XW = (X @ W).astype(bf16)
#   Tiny N x F x H GEMM, computed once per layer instead of per A_hat tile.
# ----------------------------------------------------------------------------
def _feat_xform_kernel(x_ref, w_ref, o_ref):
    o_ref[...] = jnp.dot(x_ref[...], w_ref[...],
                         preferred_element_type=jnp.float32).astype(o_ref.dtype)


def feature_transform_pallas(x, w, *, tm, vmem_limit):
    n, f = x.shape
    h = w.shape[1]
    return pl.pallas_call(
        _feat_xform_kernel,
        out_shape=jax.ShapeDtypeStruct((n, h), jnp.bfloat16),
        grid_spec=pltpu.PrefetchScalarGridSpec(
            num_scalar_prefetch=0,
            grid=(n // tm,),
            in_specs=[pl.BlockSpec((tm, f), lambda m: (m, 0)),   # X row tile
                      pl.BlockSpec((f, h), lambda m: (0, 0))],   # W resident
            out_specs=pl.BlockSpec((tm, h), lambda m: (m, 0)),
        ),
        compiler_params=pltpu.CompilerParams(
            dimension_semantics=("parallel",),
            vmem_limit_bytes=vmem_limit),
        cost_estimate=pl.CostEstimate(flops=2 * n * f * h, transcendentals=0,
                                      bytes_accessed=(n * f + n * h) * 2),
    )(x, w)


# ----------------------------------------------------------------------------
# Kernel 3: one GCNConv layer  relu(A_hat @ XW + b)
#   grid = (N/TM, N/TK); A_hat tiled (TM, TK), precomputed XW tiled (TK, H).
#   f32 VMEM accumulator, bias/ReLU only in the K-end finalize, M "parallel".
# ----------------------------------------------------------------------------
def _gcn_conv_kernel(a_ref, xw_ref, b_ref, o_ref, acc_ref):
    k = pl.program_id(1)

    @pl.when(k == 0)
    def _():
        acc_ref[...] = jnp.zeros_like(acc_ref)

    acc_ref[...] += jnp.dot(a_ref[...], xw_ref[...],
                            preferred_element_type=jnp.float32)

    @pl.when(k == pl.num_programs(1) - 1)
    def _():
        o_ref[...] = jnp.maximum(acc_ref[...] + b_ref[...], 0.0).astype(o_ref.dtype)


def gcn_conv_pallas(a_hat, xw, b, *, tm, tk, vmem_limit):
    n = a_hat.shape[0]
    h = xw.shape[1]
    num_m, num_k = n // tm, n // tk
    flops = 2 * n * n * h
    bytes_acc = n * n * 2 + num_m * n * h * 2 + n * h * 2 + h * 4
    return pl.pallas_call(
        _gcn_conv_kernel,
        out_shape=jax.ShapeDtypeStruct((n, h), jnp.bfloat16),
        grid_spec=pltpu.PrefetchScalarGridSpec(
            num_scalar_prefetch=0,
            grid=(num_m, num_k),
            in_specs=[
                pl.BlockSpec((tm, tk), lambda m, k: (m, k)),   # A_hat tile (bf16)
                pl.BlockSpec((tk, h), lambda m, k: (k, 0)),    # XW tile (bf16)
                pl.BlockSpec((1, h), lambda m, k: (0, 0)),     # bias (f32)
            ],
            out_specs=pl.BlockSpec((tm, h), lambda m, k: (m, 0)),
            scratch_shapes=[pltpu.VMEM((tm, h), jnp.float32)],
        ),
        compiler_params=pltpu.CompilerParams(
            # Row tiles are independent -> shard across v7x's 2 TensorCores.
            dimension_semantics=("parallel", "arbitrary"),
            vmem_limit_bytes=vmem_limit,
        ),
        cost_estimate=pl.CostEstimate(flops=flops, transcendentals=0,
                                      bytes_accessed=bytes_acc),
    )(a_hat, xw, b)


# ----------------------------------------------------------------------------
# Kernel 4: global_mean_pool + dropout(eval) + linear head
#   pooled = P @ H2 accumulated in a resident (G, H) scratch; the classifier
#   runs once at the last grid step into a lane-dense (G, 128) output.
# ----------------------------------------------------------------------------
def _pool_head_kernel(p_ref, h_ref, wl_ref, bl_ref, o_ref, pool_ref):
    k = pl.program_id(0)

    @pl.when(k == 0)
    def _():
        pool_ref[...] = jnp.zeros_like(pool_ref)

    pool_ref[...] += jnp.dot(p_ref[...], h_ref[...],
                             preferred_element_type=jnp.float32)

    @pl.when(k == pl.num_programs(0) - 1)
    def _():
        # dropout: eval-mode identity.
        # TODO(synk): training-mode dropout needs pltpu.prng_seed/prng_random_bits.
        o_ref[...] = (jnp.dot(pool_ref[...], wl_ref[...],
                              preferred_element_type=jnp.float32)
                      + bl_ref[...]).astype(o_ref.dtype)


def pool_head_pallas(pool_mat, h2, w_lin, b_lin, *, tk, vmem_limit):
    g, n = pool_mat.shape
    hd = h2.shape[1]
    c_pad = w_lin.shape[1]
    num_k = n // tk
    return pl.pallas_call(
        _pool_head_kernel,
        out_shape=jax.ShapeDtypeStruct((g, c_pad), jnp.float32),
        grid_spec=pltpu.PrefetchScalarGridSpec(
            num_scalar_prefetch=0,
            grid=(num_k,),
            in_specs=[
                pl.BlockSpec((g, tk), lambda k: (0, k)),        # P col tile (f32)
                pl.BlockSpec((tk, hd), lambda k: (k, 0)),       # H2 row tile (bf16)
                pl.BlockSpec((hd, c_pad), lambda k: (0, 0)),    # W_lin (padded)
                pl.BlockSpec((1, c_pad), lambda k: (0, 0)),     # b_lin (padded)
            ],
            out_specs=pl.BlockSpec((g, c_pad), lambda k: (0, 0)),
            scratch_shapes=[pltpu.VMEM((g, hd), jnp.float32)],
        ),
        compiler_params=pltpu.CompilerParams(
            dimension_semantics=("arbitrary",),
            vmem_limit_bytes=vmem_limit,
        ),
        cost_estimate=pl.CostEstimate(
            flops=2 * g * n * hd + 2 * g * hd * c_pad, transcendentals=0,
            bytes_accessed=g * n * 4 + n * hd * 2 + hd * c_pad * 4),
    )(pool_mat, h2, w_lin, b_lin)


# ----------------------------------------------------------------------------
# Plain-JAX glue: PyG gcn_norm to a dense padded adjacency, pool matrix.
# ----------------------------------------------------------------------------
def build_dense_norm_adj(edge_index, edge_weight, num_nodes, n_pad,
                         out_dtype=jnp.bfloat16):
    """Padded dense A_hat with A_hat[dst, src] = d^-1/2[src]*w*d^-1/2[dst],
    self loops added with weight 1 (PyG GCNConv gcn_norm semantics).
    Scatter goes straight into the padded layout (f32 accumulation for
    duplicate edges) followed by a single cast — no separate pad pass."""
    src = edge_index[0].astype(jnp.int32)
    dst = edge_index[1].astype(jnp.int32)
    loop = jnp.arange(num_nodes, dtype=jnp.int32)
    src = jnp.concatenate([src, loop])
    dst = jnp.concatenate([dst, loop])
    ew = jnp.concatenate([edge_weight, jnp.ones(num_nodes, edge_weight.dtype)])
    deg = jnp.zeros((num_nodes,), jnp.float32).at[dst].add(ew)
    dis = jnp.where(deg > 0, jax.lax.rsqrt(deg), 0.0)
    norm = dis[src] * ew * dis[dst]
    a_hat = (jnp.zeros((n_pad, n_pad), jnp.float32)
             .at[dst, src].add(norm)
             .astype(out_dtype))
    return a_hat


def build_pool_matrix(batch, num_graphs, num_nodes, n_pad):
    counts = jnp.zeros((num_graphs,), jnp.float32).at[batch].add(1.0)
    inv = jnp.where(counts > 0, 1.0 / counts, 0.0)
    pool = jnp.zeros((num_graphs, n_pad), jnp.float32)
    pool = pool.at[batch, jnp.arange(num_nodes)].set(1.0)
    return pool * inv[:, None]                                 # (G, n_pad)


# ----------------------------------------------------------------------------
# Forward pass.
# ----------------------------------------------------------------------------
def gcn_forward(params, x, edge_index, edge_attr, batch, num_graphs):
    n = x.shape[0]
    num_classes = params["w_lin"].shape[1]

    # edge_embedding(cat([edge_index, edge_attr.T], 0).T)
    # Note: node indices are fed as f32 features (as in the torch module);
    # indices above 2^24 would lose precision.
    ew = edge_embedding_pallas(edge_index.astype(jnp.float32), edge_attr,
                               params["edge_mlp"])

    n_pad, tm, tk, vmem_limit = _choose_tiling(n)

    a_hat = build_dense_norm_adj(edge_index, ew, n, n_pad)        # bf16, padded
    pool_mat = build_pool_matrix(batch, num_graphs, n, n_pad)     # f32, padded

    x_p = jnp.zeros((n_pad, x.shape[1]), jnp.bfloat16).at[:n].set(
        x.astype(jnp.bfloat16))

    # Lane-dense classifier output: pad C up to 128 and slice in the wrapper.
    c_pad = _round_up(num_classes, 128)
    w_lin_p = jnp.pad(params["w_lin"], ((0, 0), (0, c_pad - num_classes)))
    b_lin_p = jnp.pad(params["b_lin"], ((0, 0), (0, c_pad - num_classes)))

    # conv1: hoisted XW, then streamed A_hat @ XW (+b, relu).
    xw1 = feature_transform_pallas(x_p, params["w1"].astype(jnp.bfloat16),
                                   tm=tm, vmem_limit=vmem_limit)
    h1 = gcn_conv_pallas(a_hat, xw1, params["b1"], tm=tm, tk=tk,
                         vmem_limit=vmem_limit)

    # stem conv: same structure (un-fused so the M axis stays "parallel").
    h1w2 = feature_transform_pallas(h1, params["w2"].astype(jnp.bfloat16),
                                    tm=tm, vmem_limit=vmem_limit)
    h2 = gcn_conv_pallas(a_hat, h1w2, params["b2"], tm=tm, tk=tk,
                         vmem_limit=vmem_limit)

    # global_mean_pool -> dropout(eval) -> lin1.
    out = pool_head_pallas(pool_mat, h2, w_lin_p, b_lin_p, tk=tk,
                           vmem_limit=vmem_limit)
    return out[:, :num_classes]


# ----------------------------------------------------------------------------
# Pure-JAX f32 reference (for tolerance check) and parameter init.
# ----------------------------------------------------------------------------
def gcn_reference(params, x, edge_index, edge_attr, batch, num_graphs):
    p = params["edge_mlp"]
    feats = jnp.concatenate([edge_index.astype(jnp.float32), edge_attr.T],
                            axis=0).T                               # (E, 3)
    h = jnp.maximum(feats @ p[0:3] + p[3], 0.0)
    ew = jax.nn.sigmoid(p[4] * h + p[5])
    n = x.shape[0]
    a_hat = build_dense_norm_adj(edge_index, ew, n, n, out_dtype=jnp.float32)
    h1 = jnp.maximum(a_hat @ (x @ params["w1"]) + params["b1"], 0.0)
    h2 = jnp.maximum(a_hat @ (h1 @ params["w2"]) + params["b2"], 0.0)
    pool = build_pool_matrix(batch, num_graphs, n, n)
    return (pool @ h2) @ params["w_lin"] + params["b_lin"]


def init_params(key, feature_dim, hidden_dim, num_classes):
    ks = jax.random.split(key, 10)
    glorot = lambda k, shp: (jax.random.normal(k, shp, jnp.float32)
                             / jnp.sqrt(jnp.float32(shp[0])))
    edge_w1 = jax.random.normal(ks[0], (3,), jnp.float32) * 0.5   # Linear(3,1).weight
    edge_b1 = jax.random.normal(ks[1], (), jnp.float32) * 0.1
    edge_w2 = jax.random.normal(ks[2], (), jnp.float32) * 0.5     # Linear(1,1).weight
    edge_b2 = jax.random.normal(ks[3], (), jnp.float32) * 0.1
    edge_mlp = jnp.concatenate([edge_w1,
                                jnp.stack([edge_b1, edge_w2, edge_b2]),
                                jnp.zeros((2,), jnp.float32)])    # f32[8] for SMEM
    return {
        "edge_mlp": edge_mlp,
        "w1": glorot(ks[4], (feature_dim, hidden_dim)),           # GCNConv1 weight
        "b1": jax.random.normal(ks[5], (1, hidden_dim), jnp.float32) * 0.1,
        "w2": glorot(ks[6], (hidden_dim, hidden_dim)),            # stem GCNConv weight
        "b2": jax.random.normal(ks[7], (1, hidden_dim), jnp.float32) * 0.1,
        "w_lin": glorot(ks[8], (hidden_dim, num_classes)),        # lin1
        "b_lin": jax.random.normal(ks[9], (1, num_classes), jnp.float32) * 0.1,
    }


if __name__ == "__main__":
    N, FEAT, HID, NUM_CLASSES, NUM_GRAPHS, E = 16, 8, 32, 4, 2, 40

    key = jax.random.PRNGKey(0)
    k_src, k_dst, k_attr, k_x, k_par = jax.random.split(key, 5)

    src = jax.random.randint(k_src, (E,), 0, N, dtype=jnp.int32)
    dst = jax.random.randint(k_dst, (E,), 0, N, dtype=jnp.int32)
    edge_index = jnp.stack([src, dst], axis=0)                    # (2, E)
    edge_attr = jax.random.uniform(k_attr, (E, 1), jnp.float32)   # (E, 1)
    x = jax.random.normal(k_x, (N, FEAT), jnp.float32)            # (N, F)
    batch = jnp.concatenate([jnp.zeros((N // 2,), jnp.int32),
                             jnp.ones((N - N // 2,), jnp.int32)]) # 2 graphs

    params = init_params(k_par, FEAT, HID, NUM_CLASSES)

    fwd = jax.jit(gcn_forward, static_argnums=(5,))
    out = fwd(params, x, edge_index, edge_attr, batch, NUM_GRAPHS)
    out = jax.block_until_ready(out)
    ref = gcn_reference(params, x, edge_index, edge_attr, batch, NUM_GRAPHS)

    assert out.shape == (NUM_GRAPHS, NUM_CLASSES)
    assert not bool(jnp.any(jnp.isnan(out)))
    assert bool(jnp.allclose(out, ref, rtol=5e-2, atol=5e-2)), (out, ref)
    print("KERNEL_OK")
</pallas_src>

<mosaic_0001>
module attributes {stable_mosaic.version = 11 : i64} {
  func.func @_edge_mlp_kernel(%arg0: i32, %arg1: memref<8xf32, #tpu.memory_space<smem>>, %arg2: memref<3x128xf32, #tpu.memory_space<vmem>>, %arg3: memref<1x128xf32, #tpu.memory_space<vmem>>) attributes {dimension_semantics = [#tpu.dimension_semantics<parallel>], iteration_bounds = array<i64: 1>, scalar_prefetch = 0 : i64, scratch_operands = 0 : i64, tpu.core_type = #tpu.core_type<tc>, window_params = [{transform_indices = @transform_0, window_bounds = array<i64: 8>}, {transform_indices = @transform_1, window_bounds = array<i64: 3, 128>}, {transform_indices = @transform_2, window_bounds = array<i64: 1, 128>}]} {
    %c0 = arith.constant 0 : index
    %0 = memref.load %arg1[%c0] : memref<8xf32, #tpu.memory_space<smem>>
    %c0_0 = arith.constant 0 : index
    %c0_1 = arith.constant 0 : index
    %1 = vector.load %arg2[%c0_0, %c0_1] : memref<3x128xf32, #tpu.memory_space<vmem>>, vector<1x128xf32>
    %2 = vector.broadcast %0 : f32 to vector<1x128xf32>
    %3 = arith.mulf %2, %1 : vector<1x128xf32>
    %c1 = arith.constant 1 : index
    %4 = memref.load %arg1[%c1] : memref<8xf32, #tpu.memory_space<smem>>
    %c1_2 = arith.constant 1 : index
    %c0_3 = arith.constant 0 : index
    %5 = vector.load %arg2[%c1_2, %c0_3] : memref<3x128xf32, #tpu.memory_space<vmem>>, vector<1x128xf32>
    %6 = vector.broadcast %4 : f32 to vector<1x128xf32>
    %7 = arith.mulf %6, %5 : vector<1x128xf32>
    %8 = arith.addf %3, %7 : vector<1x128xf32>
    %c2 = arith.constant 2 : index
    %9 = memref.load %arg1[%c2] : memref<8xf32, #tpu.memory_space<smem>>
    %c2_4 = arith.constant 2 : index
    %c0_5 = arith.constant 0 : index
    %10 = vector.load %arg2[%c2_4, %c0_5] : memref<3x128xf32, #tpu.memory_space<vmem>>, vector<1x128xf32>
    %11 = vector.broadcast %9 : f32 to vector<1x128xf32>
    %12 = arith.mulf %11, %10 : vector<1x128xf32>
    %13 = arith.addf %8, %12 : vector<1x128xf32>
    %c3 = arith.constant 3 : index
    %14 = memref.load %arg1[%c3] : memref<8xf32, #tpu.memory_space<smem>>
    %15 = vector.broadcast %14 : f32 to vector<1x128xf32>
    %16 = arith.addf %13, %15 : vector<1x128xf32>
    %cst = arith.constant 0.000000e+00 : f32
    %17 = vector.broadcast %cst : f32 to vector<1x128xf32>
    %18 = arith.maximumf %16, %17 : vector<1x128xf32>
    %c4 = arith.constant 4 : index
    %19 = memref.load %arg1[%c4] : memref<8xf32, #tpu.memory_space<smem>>
    %20 = vector.broadcast %19 : f32 to vector<1x128xf32>
    %21 = arith.mulf %20, %18 : vector<1x128xf32>
    %c5 = arith.constant 5 : index
    %22 = memref.load %arg1[%c5] : memref<8xf32, #tpu.memory_space<smem>>
    %23 = vector.broadcast %22 : f32 to vector<1x128xf32>
    %24 = arith.addf %21, %23 : vector<1x128xf32>
    %25 = arith.negf %24 : vector<1x128xf32>
    %26 = math.exp %25 : vector<1x128xf32>
    %cst_6 = arith.constant 1.000000e+00 : f32
    %27 = vector.broadcast %cst_6 : f32 to vector<1x128xf32>
    %28 = arith.addf %27, %26 : vector<1x128xf32>
    %29 = arith.divf %27, %28 : vector<1x128xf32>
    %c0_7 = arith.constant 0 : index
    %c0_8 = arith.constant 0 : index
    %30 = vector.load %arg3[%c0_7, %c0_8] : memref<1x128xf32, #tpu.memory_space<vmem>>, vector<1x128xf32>
    tpu.vector_store %arg3[%c0_7, %c0_8], %29 {strides = array<i32>} : memref<1x128xf32, #tpu.memory_space<vmem>>, vector<1x128xf32>,
    return
  }
  func.func @transform_0(%arg0: i32) -> i32 {
    %c0_i32 = arith.constant 0 : i32
    %c0_i32_0 = arith.constant 0 : i32
    return %c0_i32 : i32
  }
  func.func @transform_1(%arg0: i32) -> (i32, i32) {
    %c0_i32 = arith.constant 0 : i32
    %c0_i32_0 = arith.constant 0 : i32
    return %c0_i32, %arg0 : i32, i32
  }
  func.func @transform_2(%arg0: i32) -> (i32, i32) {
    %c0_i32 = arith.constant 0 : i32
    %c0_i32_0 = arith.constant 0 : i32
    return %c0_i32, %arg0 : i32, i32
  }
}

module attributes {stable_mosaic.version = 11 : i64} {
  func.func @_feat_xform_kernel(%arg0: i32, %arg1: memref<256x32xbf16, #tpu.memory_space<vmem>>, %arg2: memref<32x32xbf16, #tpu.memory_space<vmem>>, %arg3: memref<256x32xbf16, #tpu.memory_space<vmem>>) attributes {dimension_semantics = [#tpu.dimension_semantics<parallel>], iteration_bounds = array<i64: 1>, scalar_prefetch = 0 : i64, scratch_operands = 0 : i64, tpu.core_type = #tpu.core_type<tc>, window_params = [{transform_indices = @transform_0, window_bounds = array<i64: 256, 32>}, {pipeline_mode = #tpu.pipeline_mode<synchronous>, transform_indices = @transform_1, window_bounds = array<i64: 32, 32>}, {transform_indices = @transform_2, window_bounds = array<i64: 256, 32>}]} {
    %c0 = arith.constant 0 : index
    %c0_0 = arith.constant 0 : index
    %0 = vector.load %arg1[%c0, %c0_0] : memref<256x32xbf16, #tpu.memory_space<vmem>>, vector<256x32xbf16>
    %c0_1 = arith.constant 0 : index
    %c0_2 = arith.constant 0 : index
    %1 = vector.load %arg2[%c0_1, %c0_2] : memref<32x32xbf16, #tpu.memory_space<vmem>>, vector<32x32xbf16>
    %cst = arith.constant dense<0.000000e+00> : vector<256x32xf32>
    %2 = tpu.matmul %0, %1, %cst {dimension_numbers = #tpu.dot_dimension_numbers<[1], [0], [0], [1], [0, 0, 1, 1], [], []>} : vector<256x32xbf16>, vector<32x32xbf16>, vector<256x32xf32> -> vector<256x32xf32>
    %3 = arith.truncf %2 : vector<256x32xf32> to vector<256x32xbf16>
    %c0_3 = arith.constant 0 : index
    %c0_4 = arith.constant 0 : index
    %4 = vector.load %arg3[%c0_3, %c0_4] : memref<256x32xbf16, #tpu.memory_space<vmem>>, vector<256x32xbf16>
    tpu.vector_store %arg3[%c0_3, %c0_4], %3 {strides = array<i32>} : memref<256x32xbf16, #tpu.memory_space<vmem>>, vector<256x32xbf16>,
    return
  }
  func.func @transform_0(%arg0: i32) -> (i32, i32) {
    %c0_i32 = arith.constant 0 : i32
    %c0_i32_0 = arith.constant 0 : i32
    return %arg0, %c0_i32 : i32, i32
  }
  func.func @transform_1(%arg0: i32) -> (i32, i32) {
    %c0_i32 = arith.constant 0 : i32
    %c0_i32_0 = arith.constant 0 : i32
    %c0_i32_1 = arith.constant 0 : i32
    return %c0_i32, %c0_i32_0 : i32, i32
  }
  func.func @transform_2(%arg0: i32) -> (i32, i32) {
    %c0_i32 = arith.constant 0 : i32
    %c0_i32_0 = arith.constant 0 : i32
    return %arg0, %c0_i32 : i32, i32
  }
}

module attributes {stable_mosaic.version = 11 : i64} {
  func.func @_gcn_conv_kernel(%arg0: i32, %arg1: i32, %arg2: memref<256x256xbf16, #tpu.memory_space<vmem>>, %arg3: memref<256x32xbf16, #tpu.memory_space<vmem>>, %arg4: memref<1x32xf32, #tpu.memory_space<vmem>>, %arg5: memref<256x32xbf16, #tpu.memory_space<vmem>>, %arg6: memref<256x32xf32, #tpu.memory_space<vmem>>) attributes {dimension_semantics = [#tpu.dimension_semantics<parallel>, #tpu.dimension_semantics<arbitrary>], iteration_bounds = array<i64: 1, 1>, scalar_prefetch = 0 : i64, scratch_operands = 1 : i64, tpu.core_type = #tpu.core_type<tc>, window_params = [{transform_indices = @transform_0, window_bounds = array<i64: 256, 256>}, {transform_indices = @transform_1, window_bounds = array<i64: 256, 32>}, {pipeline_mode = #tpu.pipeline_mode<synchronous>, transform_indices = @transform_2, window_bounds = array<i64: 1, 32>}, {transform_indices = @transform_3, window_bounds = array<i64: 256, 32>}]} {
    %c0_i32 = arith.constant 0 : i32
    %0 = arith.cmpi eq, %arg1, %c0_i32 : i32
    %1 = arith.extui %0 : i1 to i32
    %c0_i32_0 = arith.constant 0 : i32
    %2 = arith.cmpi ne, %1, %c0_i32_0 : i32
    scf.if %2 {
      %cst_10 = arith.constant 0.000000e+00 : f32
      %12 = vector.broadcast %cst_10 : f32 to vector<256x32xf32>
      %c0_11 = arith.constant 0 : index
      %c0_12 = arith.constant 0 : index
      %13 = vector.load %arg6[%c0_11, %c0_12] : memref<256x32xf32, #tpu.memory_space<vmem>>, vector<256x32xf32>
      tpu.vector_store %arg6[%c0_11, %c0_12], %12 {strides = array<i32>} : memref<256x32xf32, #tpu.memory_space<vmem>>, vector<256x32xf32>,
    } else {
    }
    %c0 = arith.constant 0 : index
    %c0_1 = arith.constant 0 : index
    %3 = vector.load %arg6[%c0, %c0_1] : memref<256x32xf32, #tpu.memory_space<vmem>>, vector<256x32xf32>
    %c0_2 = arith.constant 0 : index
    %c0_3 = arith.constant 0 : index
    %4 = vector.load %arg2[%c0_2, %c0_3] : memref<256x256xbf16, #tpu.memory_space<vmem>>, vector<256x256xbf16>
    %c0_4 = arith.constant 0 : index
    %c0_5 = arith.constant 0 : index
    %5 = vector.load %arg3[%c0_4, %c0_5] : memref<256x32xbf16, #tpu.memory_space<vmem>>, vector<256x32xbf16>
    %cst = arith.constant dense<0.000000e+00> : vector<256x32xf32>
    %6 = tpu.matmul %4, %5, %cst {dimension_numbers = #tpu.dot_dimension_numbers<[1], [0], [0], [1], [0, 0, 1, 1], [], []>} : vector<256x256xbf16>, vector<256x32xbf16>, vector<256x32xf32> -> vector<256x32xf32>
    %7 = arith.addf %3, %6 : vector<256x32xf32>
    %c0_6 = arith.constant 0 : index
    %c0_7 = arith.constant 0 : index
    %8 = vector.load %arg6[%c0_6, %c0_7] : memref<256x32xf32, #tpu.memory_space<vmem>>, vector<256x32xf32>
    tpu.vector_store %arg6[%c0_6, %c0_7], %7 {strides = array<i32>} : memref<256x32xf32, #tpu.memory_space<vmem>>, vector<256x32xf32>,
    %c0_i32_8 = arith.constant 0 : i32
    %9 = arith.cmpi eq, %arg1, %c0_i32_8 : i32
    %10 = arith.extui %9 : i1 to i32
    %c0_i32_9 = arith.constant 0 : i32
    %11 = arith.cmpi ne, %10, %c0_i32_9 : i32
    scf.if %11 {
      %c0_10 = arith.constant 0 : index
      %c0_11 = arith.constant 0 : index
      %12 = vector.load %arg6[%c0_10, %c0_11] : memref<256x32xf32, #tpu.memory_space<vmem>>, vector<256x32xf32>
      %c0_12 = arith.constant 0 : index
      %c0_13 = arith.constant 0 : index
      %13 = vector.load %arg4[%c0_12, %c0_13] : memref<1x32xf32, #tpu.memory_space<vmem>>, vector<1x32xf32>
      %14 = vector.broadcast %13 : vector<1x32xf32> to vector<256x32xf32>
      %15 = arith.addf %12, %14 : vector<256x32xf32>
      %cst_14 = arith.constant 0.000000e+00 : f32
      %16 = vector.broadcast %cst_14 : f32 to vector<256x32xf32>
      %17 = arith.maximumf %15, %16 : vector<256x32xf32>
      %18 = arith.truncf %17 : vector<256x32xf32> to vector<256x32xbf16>
      %c0_15 = arith.constant 0 : index
      %c0_16 = arith.constant 0 : index
      %19 = vector.load %arg5[%c0_15, %c0_16] : memref<256x32xbf16, #tpu.memory_space<vmem>>, vector<256x32xbf16>
      tpu.vector_store %arg5[%c0_15, %c0_16], %18 {strides = array<i32>} : memref<256x32xbf16, #tpu.memory_space<vmem>>, vector<256x32xbf16>,
    } else {
    }
    return
  }
  func.func @transform_0(%arg0: i32, %arg1: i32) -> (i32, i32) {
    %c0_i32 = arith.constant 0 : i32
    return %arg0, %arg1 : i32, i32
  }
  func.func @transform_1(%arg0: i32, %arg1: i32) -> (i32, i32) {
    %c0_i32 = arith.constant 0 : i32
    %c0_i32_0 = arith.constant 0 : i32
    return %arg1, %c0_i32 : i32, i32
  }
  func.func @transform_2(%arg0: i32, %arg1: i32) -> (i32, i32) {
    %c0_i32 = arith.constant 0 : i32
    %c0_i32_0 = arith.constant 0 : i32
    %c0_i32_1 = arith.constant 0 : i32
    return %c0_i32, %c0_i32_0 : i32, i32
  }
  func.func @transform_3(%arg0: i32, %arg1: i32) -> (i32, i32) {
    %c0_i32 = arith.constant 0 : i32
    %c0_i32_0 = arith.constant 0 : i32
    return %arg0, %c0_i32 : i32, i32
  }
}

module attributes {stable_mosaic.version = 11 : i64} {
  func.func @_feat_xform_kernel(%arg0: i32, %arg1: memref<256x8xbf16, #tpu.memory_space<vmem>>, %arg2: memref<8x32xbf16, #tpu.memory_space<vmem>>, %arg3: memref<256x32xbf16, #tpu.memory_space<vmem>>) attributes {dimension_semantics = [#tpu.dimension_semantics<parallel>], iteration_bounds = array<i64: 1>, scalar_prefetch = 0 : i64, scratch_operands = 0 : i64, tpu.core_type = #tpu.core_type<tc>, window_params = [{transform_indices = @transform_0, window_bounds = array<i64: 256, 8>}, {pipeline_mode = #tpu.pipeline_mode<synchronous>, transform_indices = @transform_1, window_bounds = array<i64: 8, 32>}, {transform_indices = @transform_2, window_bounds = array<i64: 256, 32>}]} {
    %c0 = arith.constant 0 : index
    %c0_0 = arith.constant 0 : index
    %0 = vector.load %arg1[%c0, %c0_0] : memref<256x8xbf16, #tpu.memory_space<vmem>>, vector<256x8xbf16>
    %c0_1 = arith.constant 0 : index
    %c0_2 = arith.constant 0 : index
    %1 = vector.load %arg2[%c0_1, %c0_2] : memref<8x32xbf16, #tpu.memory_space<vmem>>, vector<8x32xbf16>
    %cst = arith.constant dense<0.000000e+00> : vector<256x32xf32>
    %2 = tpu.matmul %0, %1, %cst {dimension_numbers = #tpu.dot_dimension_numbers<[1], [0], [0], [1], [0, 0, 1, 1], [], []>} : vector<256x8xbf16>, vector<8x32xbf16>, vector<256x32xf32> -> vector<256x32xf32>
    %3 = arith.truncf %2 : vector<256x32xf32> to vector<256x32xbf16>
    %c0_3 = arith.constant 0 : index
    %c0_4 = arith.constant 0 : index
    %4 = vector.load %arg3[%c0_3, %c0_4] : memref<256x32xbf16, #tpu.memory_space<vmem>>, vector<256x32xbf16>
    tpu.vector_store %arg3[%c0_3, %c0_4], %3 {strides = array<i32>} : memref<256x32xbf16, #tpu.memory_space<vmem>>, vector<256x32xbf16>,
    return
  }
  func.func @transform_0(%arg0: i32) -> (i32, i32) {
    %c0_i32 = arith.constant 0 : i32
    %c0_i32_0 = arith.constant 0 : i32
    return %arg0, %c0_i32 : i32, i32
  }
  func.func @transform_1(%arg0: i32) -> (i32, i32) {
    %c0_i32 = arith.constant 0 : i32
    %c0_i32_0 = arith.constant 0 : i32
    %c0_i32_1 = arith.constant 0 : i32
    return %c0_i32, %c0_i32_0 : i32, i32
  }
  func.func @transform_2(%arg0: i32) -> (i32, i32) {
    %c0_i32 = arith.constant 0 : i32
    %c0_i32_0 = arith.constant 0 : i32
    return %arg0, %c0_i32 : i32, i32
  }
}

module attributes {stable_mosaic.version = 11 : i64} {
  func.func @_pool_head_kernel(%arg0: i32, %arg1: memref<2x256xf32, #tpu.memory_space<vmem>>, %arg2: memref<256x32xbf16, #tpu.memory_space<vmem>>, %arg3: memref<32x128xf32, #tpu.memory_space<vmem>>, %arg4: memref<1x128xf32, #tpu.memory_space<vmem>>, %arg5: memref<2x128xf32, #tpu.memory_space<vmem>>, %arg6: memref<2x32xf32, #tpu.memory_space<vmem>>) attributes {dimension_semantics = [#tpu.dimension_semantics<arbitrary>], iteration_bounds = array<i64: 1>, scalar_prefetch = 0 : i64, scratch_operands = 1 : i64, tpu.core_type = #tpu.core_type<tc>, window_params = [{transform_indices = @transform_0, window_bounds = array<i64: 2, 256>}, {transform_indices = @transform_1, window_bounds = array<i64: 256, 32>}, {pipeline_mode = #tpu.pipeline_mode<synchronous>, transform_indices = @transform_2, window_bounds = array<i64: 32, 128>}, {pipeline_mode = #tpu.pipeline_mode<synchronous>, transform_indices = @transform_3, window_bounds = array<i64: 1, 128>}, {pipeline_mode = #tpu.pipeline_mode<synchronous>, transform_indices = @transform_4, window_bounds = array<i64: 2, 128>}]} {
    %c0_i32 = arith.constant 0 : i32
    %0 = arith.cmpi eq, %arg0, %c0_i32 : i32
    %1 = arith.extui %0 : i1 to i32
    %c0_i32_0 = arith.constant 0 : i32
    %2 = arith.cmpi ne, %1, %c0_i32_0 : i32
    scf.if %2 {
      %cst_10 = arith.constant 0.000000e+00 : f32
      %12 = vector.broadcast %cst_10 : f32 to vector<2x32xf32>
      %c0_11 = arith.constant 0 : index
      %c0_12 = arith.constant 0 : index
      %13 = vector.load %arg6[%c0_11, %c0_12] : memref<2x32xf32, #tpu.memory_space<vmem>>, vector<2x32xf32>
      tpu.vector_store %arg6[%c0_11, %c0_12], %12 {strides = array<i32>} : memref<2x32xf32, #tpu.memory_space<vmem>>, vector<2x32xf32>,
    } else {
    }
    %c0 = arith.constant 0 : index
    %c0_1 = arith.constant 0 : index
    %3 = vector.load %arg6[%c0, %c0_1] : memref<2x32xf32, #tpu.memory_space<vmem>>, vector<2x32xf32>
    %c0_2 = arith.constant 0 : index
    %c0_3 = arith.constant 0 : index
    %4 = vector.load %arg1[%c0_2, %c0_3] : memref<2x256xf32, #tpu.memory_space<vmem>>, vector<2x256xf32>
    %c0_4 = arith.constant 0 : index
    %c0_5 = arith.constant 0 : index
    %5 = vector.load %arg2[%c0_4, %c0_5] : memref<256x32xbf16, #tpu.memory_space<vmem>>, vector<256x32xbf16>
    %cst = arith.constant dense<0.000000e+00> : vector<2x32xf32>
    %6 = tpu.matmul %4, %5, %cst {dimension_numbers = #tpu.dot_dimension_numbers<[1], [0], [0], [1], [0, 0, 1, 1], [], []>} : vector<2x256xf32>, vector<256x32xbf16>, vector<2x32xf32> -> vector<2x32xf32>
    %7 = arith.addf %3, %6 : vector<2x32xf32>
    %c0_6 = arith.constant 0 : index
    %c0_7 = arith.constant 0 : index
    %8 = vector.load %arg6[%c0_6, %c0_7] : memref<2x32xf32, #tpu.memory_space<vmem>>, vector<2x32xf32>
    tpu.vector_store %arg6[%c0_6, %c0_7], %7 {strides = array<i32>} : memref<2x32xf32, #tpu.memory_space<vmem>>, vector<2x32xf32>,
    %c0_i32_8 = arith.constant 0 : i32
    %9 = arith.cmpi eq, %arg0, %c0_i32_8 : i32
    %10 = arith.extui %9 : i1 to i32
    %c0_i32_9 = arith.constant 0 : i32
    %11 = arith.cmpi ne, %10, %c0_i32_9 : i32
    scf.if %11 {
      %c0_10 = arith.constant 0 : index
      %c0_11 = arith.constant 0 : index
      %12 = vector.load %arg6[%c0_10, %c0_11] : memref<2x32xf32, #tpu.memory_space<vmem>>, vector<2x32xf32>
      %c0_12 = arith.constant 0 : index
      %c0_13 = arith.constant 0 : index
      %13 = vector.load %arg3[%c0_12, %c0_13] : memref<32x128xf32, #tpu.memory_space<vmem>>, vector<32x128xf32>
      %cst_14 = arith.constant dense<0.000000e+00> : vector<2x128xf32>
      %14 = tpu.matmul %12, %13, %cst_14 {dimension_numbers = #tpu.dot_dimension_numbers<[1], [0], [0], [1], [0, 0, 1, 1], [], []>} : vector<2x32xf32>, vector<32x128xf32>, vector<2x128xf32> -> vector<2x128xf32>
      %c0_15 = arith.constant 0 : index
      %c0_16 = arith.constant 0 : index
      %15 = vector.load %arg4[%c0_15, %c0_16] : memref<1x128xf32, #tpu.memory_space<vmem>>, vector<1x128xf32>
      %16 = vector.broadcast %15 : vector<1x128xf32> to vector<2x128xf32>
      %17 = arith.addf %14, %16 : vector<2x128xf32>
      %c0_17 = arith.constant 0 : index
      %c0_18 = arith.constant 0 : index
      %18 = vector.load %arg5[%c0_17, %c0_18] : memref<2x128xf32, #tpu.memory_space<vmem>>, vector<2x128xf32>
      tpu.vector_store %arg5[%c0_17, %c0_18], %17 {strides = array<i32>} : memref<2x128xf32, #tpu.memory_space<vmem>>, vector<2x128xf32>,
    } else {
    }
    return
  }
  func.func @transform_0(%arg0: i32) -> (i32, i32) {
    %c0_i32 = arith.constant 0 : i32
    %c0_i32_0 = arith.constant 0 : i32
    return %c0_i32, %arg0 : i32, i32
  }
  func.func @transform_1(%arg0: i32) -> (i32, i32) {
    %c0_i32 = arith.constant 0 : i32
    %c0_i32_0 = arith.constant 0 : i32
    return %arg0, %c0_i32 : i32, i32
  }
  func.func @transform_2(%arg0: i32) -> (i32, i32) {
    %c0_i32 = arith.constant 0 : i32
    %c0_i32_0 = arith.constant 0 : i32
    %c0_i32_1 = arith.constant 0 : i32
    return %c0_i32, %c0_i32_0 : i32, i32
  }
  func.func @transform_3(%arg0: i32) -> (i32, i32) {
    %c0_i32 = arith.constant 0 : i32
    %c0_i32_0 = arith.constant 0 : i32
    %c0_i32_1 = arith.constant 0 : i32
    return %c0_i32, %c0_i32_0 : i32, i32
  }
  func.func @transform_4(%arg0: i32) -> (i32, i32) {
    %c0_i32 = arith.constant 0 : i32
    %c0_i32_0 = arith.constant 0 : i32
    %c0_i32_1 = arith.constant 0 : i32
    return %c0_i32, %c0_i32_0 : i32, i32
  }
}

</mosaic_0001>

<llo_original>
// kernel: gcn_forward.6
$region0: #{gcn_forward.6}
  #allocation0 [shape = 'u32[]', space=smem, size = 0x4, offset = 0x4, fixed_abs, tag = 'smem constant byte address 0x4 - core index']
  #allocation1 [shape = 'u32[72,128]{1,0:T(1,128)}', space=vmem, size = 0x9000, scoped, tag = 'internal scratch']
  %s0 = inlined_call_operand.vmem [shape: f32[8], index: 0, kind: input, shape index: {}]
  %s1 = inlined_call_operand.vmem [shape: f32[3,128], index: 1, kind: input, shape index: {}]
  %s2 = inlined_call_operand.vmem [shape: f32[1,128], index: 2, kind: output, shape index: {}]
  %s3 = sld [smem:[#allocation0]]
  $region22: #{gcn_forward.6} parent=0
    _
  %s5 = ssub.s32 1, %s3
  %s6 = scalar_select 0, %s5, %s3
  $region1: #{gcn_forward.6} parent=0
    #allocation2 [shape = 'u8[512]{0}', space=smem, size = 0x200, scoped, tag = 'input window, operand 0, single buffered']
    #allocation3 [shape = 's32[1]{0}', space=sflag, size = 0x4, scoped, tag = 'scoped memory for gcn_forward.6']
    %7 = vsyncpa [#allocation3], 0
    // Predicated region
    $region2: #{gcn_forward.6} parent=1 // pred_check
      _
    $region3: #{gcn_forward.6} parent=1 // pred_check_branch
      %9 = sbr.rel (0) target = $region5
    $region4: #{gcn_forward.6} parent=1 // pred_region
      %11 = vsyncadd [#allocation3], 0
      %s13 = sshll.u32 %s0, 4
      %s14 = int_to_ptr.vmem [resolvable:$true] %s13
      %16 = dma.vmem_to_smem %s14, 16, [#allocation2], [#allocation3]
    $region5: #{gcn_forward.6} parent=1 // pred_fallthru
      _
    // Predicated region
    $region6: #{gcn_forward.6} parent=1 // pred_check
      _
    $region7: #{gcn_forward.6} parent=1 // pred_check_branch
      %18 = sbr.rel (0) target = $region9
    $region8: #{gcn_forward.6} parent=1 // pred_region
      _
    $region9: #{gcn_forward.6} parent=1 // pred_fallthru
      _
    // Predicated region
    $region10: #{gcn_forward.6} parent=1 // pred_check
      _
    $region11: #{gcn_forward.6} parent=1 // pred_check_branch
      %20 = sbr.rel (0) target = $region13
    $region12: #{gcn_forward.6} parent=1 // pred_region
      %22 = dma.done [#allocation3], 16
    $region13: #{gcn_forward.6} parent=1 // pred_fallthru
      _
    %23 = sfence
    %s24 = sld [smem:[#allocation2]]
    %v25 = vld [vmem:[%s1] sm:$0x1]
    %v26 = vstv %s24
    %v27 = vmul.f32 %v26, %v25
    %s28 = sld [smem:[#allocation2 + $0x1]]
    %v29 = vld [vmem:[%s1 + $0x1] sm:$0x1]
    %v30 = vstv %s28
    %v31 = vmul.f32 %v30, %v29
    %v32 = vadd.f32 %v27, %v31
    %s33 = sld [smem:[#allocation2 + $0x2]]
    %v34 = vld [vmem:[%s1 + $0x2] sm:$0x1]
    %v35 = vstv %s33
    %v36 = vmul.f32 %v35, %v34
    %v37 = vadd.f32 %v32, %v36
    %s38 = sld [smem:[#allocation2 + $0x3]]
    %v39 = vstv %s38
    %v40 = vadd.f32 %v37, %v39
    %v41 = vmax.f32 %v40, 0.0
    %s42 = sld [smem:[#allocation2 + $0x4]]
    %v43 = vstv %s42
    %v44 = vmul.f32 %v43, %v41
    %s45 = sld [smem:[#allocation2 + $0x5]]
    %v46 = vstv %s45
    %v47 = vadd.f32 %v44, %v46
    %v48 = vxor.u32 %v47, 2147483648
    %v49 = vmul.f32 %v48, 1.442695
    %v50 = vpow.pop %v49
    %v51 = vadd.f32 %v50, 1.0
    %v52 = vrcp.pop %v51
    %v53 = vmul.f32 %v51, %v52
    %v54 = vsub.f32 1.0, %v53
    %v55 = vmul.f32 %v52, %v54
    %v56 = vadd.f32 %v52, %v55
    %vm57 = vweird.f32 %v51
    %vm58 = vweird.f32 %v52
    %vm59 = vmor %vm57, %vm58
    %v60 = vsel %vm59, %v52, %v56
    %v61 = vand.u32 2147483647, %v51
    %vm62 = vcmp.eq.f32.partialorder %v61, 8.507059e+37
    %v63 = vand.u32 %v51, 2147483648
    %v64 = vor.u32 1.1754944e-38, %v63
    %v65 = vsel %vm62, %v64, %v60
    %v66 = vmul.f32 1.0, %v65
    %67 = vst [vmem:[%s2] sm:$0x1] %v66
    // Predicated region
    $region14: #{gcn_forward.6} parent=1 // pred_check
      _
    $region15: #{gcn_forward.6} parent=1 // pred_check_branch
      %69 = sbr.rel (0) target = $region17
    $region16: #{gcn_forward.6} parent=1 // pred_region
      _
    $region17: #{gcn_forward.6} parent=1 // pred_fallthru
      _
    // Predicated region
    $region18: #{gcn_forward.6} parent=1 // pred_check
      _
    $region19: #{gcn_forward.6} parent=1 // pred_check_branch
      %71 = sbr.rel (0) target = $region21
    $region20: #{gcn_forward.6} parent=1 // pred_region
      _
    $region21: #{gcn_forward.6} parent=1 // pred_fallthru
      _
    %72 = vsyncpa [#allocation3], 1

// kernel: gcn_forward.9
$region0: #{gcn_forward.9}
  #allocation0 [shape = 'u32[]', space=smem, size = 0x4, offset = 0x4, fixed_abs, tag = 'smem constant byte address 0x4 - core index']
  #allocation1 [shape = 'u32[72,128]{1,0:T(1,128)}', space=vmem, size = 0x9000, scoped, tag = 'internal scratch']
  %s0 = inlined_call_operand.vmem [shape: bf16[256,32], index: 0, kind: input, shape index: {}]
  %s1 = inlined_call_operand.vmem [shape: bf16[32,32], index: 1, kind: input, shape index: {}]
  %s2 = inlined_call_operand.vmem [shape: bf16[256,32], index: 2, kind: output, shape index: {}]
  %s3 = sld [smem:[#allocation0]]
  $region18: #{gcn_forward.9} parent=0
    _
  %s5 = ssub.s32 1, %s3
  %s6 = scalar_select 0, %s5, %s3
  // Predicated region
  $region2: #{gcn_forward.9} parent=0 // pred_check
    _
  $region3: #{gcn_forward.9} parent=0 // pred_check_branch
    %8 = sbr.rel (0) target = $region5
  $region4: #{gcn_forward.9} parent=0 // pred_region
    _
  $region5: #{gcn_forward.9} parent=0 // pred_fallthru
    _
  // Predicated region
  $region6: #{gcn_forward.9} parent=0 // pred_check
    _
  $region7: #{gcn_forward.9} parent=0 // pred_check_branch
    %10 = sbr.rel (0) target = $region9
  $region8: #{gcn_forward.9} parent=0 // pred_region
    _
  $region9: #{gcn_forward.9} parent=0 // pred_fallthru
    _
  %v12 = vld [vmem:[%s0] sm:$0xf]
  %v13 = vld [vmem:[%s0 + $0x4] sm:$0xf]
  %v14 = vld [vmem:[%s0 + $0x8] sm:$0xf]
  %v15 = vld [vmem:[%s0 + $0xc] sm:$0xf]
  %v16 = vld [vmem:[%s0 + $0x10] sm:$0xf]
  %v17 = vld [vmem:[%s0 + $0x14] sm:$0xf]
  %v18 = vld [vmem:[%s0 + $0x18] sm:$0xf]
  %v19 = vld [vmem:[%s0 + $0x1c] sm:$0xf]
  %v20 = vld [vmem:[%s0 + $0x20] sm:$0xf]
  %v21 = vld [vmem:[%s0 + $0x24] sm:$0xf]
  %v22 = vld [vmem:[%s0 + $0x28] sm:$0xf]
  %v23 = vld [vmem:[%s0 + $0x2c] sm:$0xf]
  %v24 = vld [vmem:[%s0 + $0x30] sm:$0xf]
  %v25 = vld [vmem:[%s0 + $0x34] sm:$0xf]
  %v26 = vld [vmem:[%s0 + $0x38] sm:$0xf]
  %v27 = vld [vmem:[%s0 + $0x3c] sm:$0xf]
  %v28 = vld [vmem:[%s0 + $0x40] sm:$0xf]
  %v29 = vld [vmem:[%s0 + $0x44] sm:$0xf]
  %v30 = vld [vmem:[%s0 + $0x48] sm:$0xf]
  %v31 = vld [vmem:[%s0 + $0x4c] sm:$0xf]
  %v32 = vld [vmem:[%s0 + $0x50] sm:$0xf]
  %v33 = vld [vmem:[%s0 + $0x54] sm:$0xf]
  %v34 = vld [vmem:[%s0 + $0x58] sm:$0xf]
  %v35 = vld [vmem:[%s0 + $0x5c] sm:$0xf]
  %v36 = vld [vmem:[%s0 + $0x60] sm:$0xf]
  %v37 = vld [vmem:[%s0 + $0x64] sm:$0xf]
  %v38 = vld [vmem:[%s0 + $0x68] sm:$0xf]
  %v39 = vld [vmem:[%s0 + $0x6c] sm:$0xf]
  %v40 = vld [vmem:[%s0 + $0x70] sm:$0xf]
  %v41 = vld [vmem:[%s0 + $0x74] sm:$0xf]
  %v42 = vld [vmem:[%s0 + $0x78] sm:$0xf]
  %v43 = vld [vmem:[%s0 + $0x7c] sm:$0xf]
  %v44 = vld [vmem:[%s1] sm:$0xf]
  %v45 = vld [vmem:[%s1 + $0x4] sm:$0xf]
  %v46 = vld [vmem:[%s1 + $0x8] sm:$0xf]
  %v47 = vld [vmem:[%s1 + $0xc] sm:$0xf]
  %v80 = vunpack.c.l.b16 %v12
  %v81 = vunpack.c.l.b16 %v13
  %v82 = vunpack.c.l.b16 %v14
  %v83 = vunpack.c.l.b16 %v15
  %v84 = vunpack.c.l.b16 %v16
  %v85 = vunpack.c.l.b16 %v17
  %v86 = vunpack.c.l.b16 %v18
  %v87 = vunpack.c.l.b16 %v19
  %v88 = vunpack.c.l.b16 %v20
  %v89 = vunpack.c.l.b16 %v21
  %v90 = vunpack.c.l.b16 %v22
  %v91 = vunpack.c.l.b16 %v23
  %v92 = vunpack.c.l.b16 %v24
  %v93 = vunpack.c.l.b16 %v25
  %v94 = vunpack.c.l.b16 %v26
  %v95 = vunpack.c.l.b16 %v27
  %v96 = vunpack.c.l.b16 %v28
  %v97 = vunpack.c.l.b16 %v29
  %v98 = vunpack.c.l.b16 %v30
  %v99 = vunpack.c.l.b16 %v31
  %v100 = vunpack.c.l.b16 %v32
  %v101 = vunpack.c.l.b16 %v33
  %v102 = vunpack.c.l.b16 %v34
  %v103 = vunpack.c.l.b16 %v35
  %v104 = vunpack.c.l.b16 %v36
  %v105 = vunpack.c.l.b16 %v37
  %v106 = vunpack.c.l.b16 %v38
  %v107 = vunpack.c.l.b16 %v39
  %v108 = vunpack.c.l.b16 %v40
  %v109 = vunpack.c.l.b16 %v41
  %v110 = vunpack.c.l.b16 %v42
  %v111 = vunpack.c.l.b16 %v43
  %v112 = vpack.c.b16 %v81, %v80
  %v113 = vpack.c.b16 %v83, %v82
  %v114 = vpack.c.b16 %v85, %v84
  %v115 = vpack.c.b16 %v87, %v86
  %v116 = vpack.c.b16 %v89, %v88
  %v117 = vpack.c.b16 %v91, %v90
  %v118 = vpack.c.b16 %v93, %v92
  %v119 = vpack.c.b16 %v95, %v94
  %v120 = vpack.c.b16 %v97, %v96
  %v121 = vpack.c.b16 %v99, %v98
  %v122 = vpack.c.b16 %v101, %v100
  %v123 = vpack.c.b16 %v103, %v102
  %v124 = vpack.c.b16 %v105, %v104
  %v125 = vpack.c.b16 %v107, %v106
  %v126 = vpack.c.b16 %v109, %v108
  %v127 = vpack.c.b16 %v111, %v110
  %v132 = vunpack.c.l.b16 %v44
  %v133 = vunpack.c.l.b16 %v45
  %v134 = vunpack.c.l.b16 %v46
  %v135 = vunpack.c.l.b16 %v47
  %v136 = vpack.c.b16 %v133, %v132
  %v137 = vpack.c.b16 %v135, %v134
  %vm140 = vcmask 261120
  %v142 = vsel %vm140, %v112, 0
  %v145 = vsel %vm140, %v113, 0
  %v148 = vsel %vm140, %v114, 0
  %v151 = vsel %vm140, %v115, 0
  %v154 = vsel %vm140, %v116, 0
  %v157 = vsel %vm140, %v117, 0
  %v160 = vsel %vm140, %v118, 0
  %v163 = vsel %vm140, %v119, 0
  %v166 = vsel %vm140, %v120, 0
  %v169 = vsel %vm140, %v121, 0
  %v172 = vsel %vm140, %v122, 0
  %v175 = vsel %vm140, %v123, 0
  %v178 = vsel %vm140, %v124, 0
  %v181 = vsel %vm140, %v125, 0
  %v184 = vsel %vm140, %v126, 0
  %v187 = vsel %vm140, %v127, 0
  %189 = vmatpush.bf16.msra.mxu0 0
  %190 = vmatpush.bf16.msra.mxu0 0
  %191 = vmatpush.bf16.msra.mxu0 0
  %192 = vmatpush.bf16.msra.mxu0 0
  %193 = vmatpush.bf16.msra.mxu0 0
  %194 = vmatpush.bf16.msra.mxu0 0
  %195 = vmatpush.bf16.msra.mxu0 %v137
  %196 = vmatpush.bf16.msra.mxu0 %v136
  %197 = vmatmul.bf16.gmra.mxu0 %v142
  %v198 = vpop.f32.mrf.mxu0
  %v199 = vadd.f32 0.0, %v198
  %v200 = vpop.f32.mrf.mxu0
  %v201 = vadd.f32 0.0, %v200
  %202 = vmatmul.bf16.gmra.mxu0 %v145
  %v203 = vpop.f32.mrf.mxu0
  %v204 = vadd.f32 0.0, %v203
  %v205 = vpop.f32.mrf.mxu0
  %v206 = vadd.f32 0.0, %v205
  %207 = vmatmul.bf16.gmra.mxu0 %v148
  %v208 = vpop.f32.mrf.mxu0
  %v209 = vadd.f32 0.0, %v208
  %v210 = vpop.f32.mrf.mxu0
  %v211 = vadd.f32 0.0, %v210
  %212 = vmatmul.bf16.gmra.mxu0 %v151
  %v213 = vpop.f32.mrf.mxu0
  %v214 = vadd.f32 0.0, %v213
  %v215 = vpop.f32.mrf.mxu0
  %v216 = vadd.f32 0.0, %v215
  %217 = vmatmul.bf16.gmra.mxu0 %v154
  %v218 = vpop.f32.mrf.mxu0
  %v219 = vadd.f32 0.0, %v218
  %v220 = vpop.f32.mrf.mxu0
  %v221 = vadd.f32 0.0, %v220
  %222 = vmatmul.bf16.gmra.mxu0 %v157
  %v223 = vpop.f32.mrf.mxu0
  %v224 = vadd.f32 0.0, %v223
  %v225 = vpop.f32.mrf.mxu0
  %v226 = vadd.f32 0.0, %v225
  %227 = vmatmul.bf16.gmra.mxu0 %v160
  %v228 = vpop.f32.mrf.mxu0
  %v229 = vadd.f32 0.0, %v228
  %v230 = vpop.f32.mrf.mxu0
  %v231 = vadd.f32 0.0, %v230
  %232 = vmatmul.bf16.gmra.mxu0 %v163
  %v233 = vpop.f32.mrf.mxu0
  %v234 = vadd.f32 0.0, %v233
  %v235 = vpop.f32.mrf.mxu0
  %v236 = vadd.f32 0.0, %v235
  %237 = vmatmul.bf16.gmra.mxu0 %v166
  %v238 = vpop.f32.mrf.mxu0
  %v239 = vadd.f32 0.0, %v238
  %v240 = vpop.f32.mrf.mxu0
  %v241 = vadd.f32 0.0, %v240
  %242 = vmatmul.bf16.gmra.mxu0 %v169
  %v243 = vpop.f32.mrf.mxu0
  %v244 = vadd.f32 0.0, %v243
  %v245 = vpop.f32.mrf.mxu0
  %v246 = vadd.f32 0.0, %v245
  %247 = vmatmul.bf16.gmra.mxu0 %v172
  %v248 = vpop.f32.mrf.mxu0
  %v249 = vadd.f32 0.0, %v248
  %v250 = vpop.f32.mrf.mxu0
  %v251 = vadd.f32 0.0, %v250
  %252 = vmatmul.bf16.gmra.mxu0 %v175
  %v253 = vpop.f32.mrf.mxu0
  %v254 = vadd.f32 0.0, %v253
  %v255 = vpop.f32.mrf.mxu0
  %v256 = vadd.f32 0.0, %v255
  %257 = vmatmul.bf16.gmra.mxu0 %v178
  %v258 = vpop.f32.mrf.mxu0
  %v259 = vadd.f32 0.0, %v258
  %v260 = vpop.f32.mrf.mxu0
  %v261 = vadd.f32 0.0, %v260
  %262 = vmatmul.bf16.gmra.mxu0 %v181
  %v263 = vpop.f32.mrf.mxu0
  %v264 = vadd.f32 0.0, %v263
  %v265 = vpop.f32.mrf.mxu0
  %v266 = vadd.f32 0.0, %v265
  %267 = vmatmul.bf16.gmra.mxu0 %v184
  %v268 = vpop.f32.mrf.mxu0
  %v269 = vadd.f32 0.0, %v268
  %v270 = vpop.f32.mrf.mxu0
  %v271 = vadd.f32 0.0, %v270
  %272 = vmatmul.bf16.gmra.mxu0 %v187
  %v273 = vpop.f32.mrf.mxu0
  %v274 = vadd.f32 0.0, %v273
  %v275 = vpop.f32.mrf.mxu0
  %v276 = vadd.f32 0.0, %v275
  %277 = vdwg.mxu0
  %v278 = vpack.c.bf16 %v199, %v199
  %v279 = vpack.c.bf16 %v201, %v201
  %v280 = vpack.c.bf16 %v204, %v204
  %v281 = vpack.c.bf16 %v206, %v206
  %v282 = vpack.c.bf16 %v209, %v209
  %v283 = vpack.c.bf16 %v211, %v211
  %v284 = vpack.c.bf16 %v214, %v214
  %v285 = vpack.c.bf16 %v216, %v216
  %v286 = vpack.c.bf16 %v219, %v219
  %v287 = vpack.c.bf16 %v221, %v221
  %v288 = vpack.c.bf16 %v224, %v224
  %v289 = vpack.c.bf16 %v226, %v226
  %v290 = vpack.c.bf16 %v229, %v229
  %v291 = vpack.c.bf16 %v231, %v231
  %v292 = vpack.c.bf16 %v234, %v234
  %v293 = vpack.c.bf16 %v236, %v236
  %v294 = vpack.c.bf16 %v239, %v239
  %v295 = vpack.c.bf16 %v241, %v241
  %v296 = vpack.c.bf16 %v244, %v244
  %v297 = vpack.c.bf16 %v246, %v246
  %v298 = vpack.c.bf16 %v249, %v249
  %v299 = vpack.c.bf16 %v251, %v251
  %v300 = vpack.c.bf16 %v254, %v254
  %v301 = vpack.c.bf16 %v256, %v256
  %v302 = vpack.c.bf16 %v259, %v259
  %v303 = vpack.c.bf16 %v261, %v261
  %v304 = vpack.c.bf16 %v264, %v264
  %v305 = vpack.c.bf16 %v266, %v266
  %v306 = vpack.c.bf16 %v269, %v269
  %v307 = vpack.c.bf16 %v271, %v271
  %v308 = vpack.c.bf16 %v274, %v274
  %v309 = vpack.c.bf16 %v276, %v276
  %vm310 = vcmask 257024
  %311 = vst.msk [vmem:[%s2] sm:$0xf] %vm310, %v278
  %312 = vst.msk [vmem:[%s2 + $0x4] sm:$0xf] %vm310, %v279
  %313 = vst.msk [vmem:[%s2 + $0x8] sm:$0xf] %vm310, %v280
  %314 = vst.msk [vmem:[%s2 + $0xc] sm:$0xf] %vm310, %v281
  %315 = vst.msk [vmem:[%s2 + $0x10] sm:$0xf] %vm310, %v282
  %316 = vst.msk [vmem:[%s2 + $0x14] sm:$0xf] %vm310, %v283
  %317 = vst.msk [vmem:[%s2 + $0x18] sm:$0xf] %vm310, %v284
  %318 = vst.msk [vmem:[%s2 + $0x1c] sm:$0xf] %vm310, %v285
  %319 = vst.msk [vmem:[%s2 + $0x20] sm:$0xf] %vm310, %v286
  %320 = vst.msk [vmem:[%s2 + $0x24] sm:$0xf] %vm310, %v287
  %321 = vst.msk [vmem:[%s2 + $0x28] sm:$0xf] %vm310, %v288
  %322 = vst.msk [vmem:[%s2 + $0x2c] sm:$0xf] %vm310, %v289
  %323 = vst.msk [vmem:[%s2 + $0x30] sm:$0xf] %vm310, %v290
  %324 = vst.msk [vmem:[%s2 + $0x34] sm:$0xf] %vm310, %v291
  %325 = vst.msk [vmem:[%s2 + $0x38] sm:$0xf] %vm310, %v292
  %326 = vst.msk [vmem:[%s2 + $0x3c] sm:$0xf] %vm310, %v293
  %327 = vst.msk [vmem:[%s2 + $0x40] sm:$0xf] %vm310, %v294
  %328 = vst.msk [vmem:[%s2 + $0x44] sm:$0xf] %vm310, %v295
  %329 = vst.msk [vmem:[%s2 + $0x48] sm:$0xf] %vm310, %v296
  %330 = vst.msk [vmem:[%s2 + $0x4c] sm:$0xf] %vm310, %v297
  %331 = vst.msk [vmem:[%s2 + $0x50] sm:$0xf] %vm310, %v298
  %332 = vst.msk [vmem:[%s2 + $0x54] sm:$0xf] %vm310, %v299
  %333 = vst.msk [vmem:[%s2 + $0x58] sm:$0xf] %vm310, %v300
  %334 = vst.msk [vmem:[%s2 + $0x5c] sm:$0xf] %vm310, %v301
  %335 = vst.msk [vmem:[%s2 + $0x60] sm:$0xf] %vm310, %v302
  %336 = vst.msk [vmem:[%s2 + $0x64] sm:$0xf] %vm310, %v303
  %337 = vst.msk [vmem:[%s2 + $0x68] sm:$0xf] %vm310, %v304
  %338 = vst.msk [vmem:[%s2 + $0x6c] sm:$0xf] %vm310, %v305
  %339 = vst.msk [vmem:[%s2 + $0x70] sm:$0xf] %vm310, %v306
  %340 = vst.msk [vmem:[%s2 + $0x74] sm:$0xf] %vm310, %v307
  %341 = vst.msk [vmem:[%s2 + $0x78] sm:$0xf] %vm310, %v308
  %342 = vst.msk [vmem:[%s2 + $0x7c] sm:$0xf] %vm310, %v309
  // Predicated region
  $region10: #{gcn_forward.9} parent=0 // pred_check
    _
  $region11: #{gcn_forward.9} parent=0 // pred_check_branch
    %344 = sbr.rel (0) target = $region13
  $region12: #{gcn_forward.9} parent=0 // pred_region
    _
  $region13: #{gcn_forward.9} parent=0 // pred_fallthru
    _
  // Predicated region
  $region14: #{gcn_forward.9} parent=0 // pred_check
    _
  $region15: #{gcn_forward.9} parent=0 // pred_check_branch
    %346 = sbr.rel (0) target = $region17
  $region16: #{gcn_forward.9} parent=0 // pred_region
    _
  $region17: #{gcn_forward.9} parent=0 // pred_fallthru
    _

// kernel: gcn_forward.7
$region0: #{gcn_forward.7}
  #allocation0 [shape = 'u32[]', space=smem, size = 0x4, offset = 0x4, fixed_abs, tag = 'smem constant byte address 0x4 - core index']
  #allocation1 [shape = 'u32[72,128]{1,0:T(1,128)}', space=vmem, size = 0x9000, scoped, tag = 'internal scratch']
  %s0 = inlined_call_operand.vmem [shape: bf16[256,8], index: 0, kind: input, shape index: {}]
  %s1 = inlined_call_operand.vmem [shape: bf16[8,32], index: 1, kind: input, shape index: {}]
  %s2 = inlined_call_operand.vmem [shape: bf16[256,32], index: 2, kind: output, shape index: {}]
  %s3 = sld [smem:[#allocation0]]
  $region18: #{gcn_forward.7} parent=0
    _
  %s5 = ssub.s32 1, %s3
  %s6 = scalar_select 0, %s5, %s3
  // Predicated region
  $region2: #{gcn_forward.7} parent=0 // pred_check
    _
  $region3: #{gcn_forward.7} parent=0 // pred_check_branch
    %8 = sbr.rel (0) target = $region5
  $region4: #{gcn_forward.7} parent=0 // pred_region
    _
  $region5: #{gcn_forward.7} parent=0 // pred_fallthru
    _
  // Predicated region
  $region6: #{gcn_forward.7} parent=0 // pred_check
    _
  $region7: #{gcn_forward.7} parent=0 // pred_check_branch
    %10 = sbr.rel (0) target = $region9
  $region8: #{gcn_forward.7} parent=0 // pred_region
    _
  $region9: #{gcn_forward.7} parent=0 // pred_fallthru
    _
  %v12 = vld [vmem:[%s0] sm:$0xf]
  %v13 = vld [vmem:[%s0 + $0x4] sm:$0xf]
  %v14 = vld [vmem:[%s0 + $0x8] sm:$0xf]
  %v15 = vld [vmem:[%s0 + $0xc] sm:$0xf]
  %v16 = vld [vmem:[%s0 + $0x10] sm:$0xf]
  %v17 = vld [vmem:[%s0 + $0x14] sm:$0xf]
  %v18 = vld [vmem:[%s0 + $0x18] sm:$0xf]
  %v19 = vld [vmem:[%s0 + $0x1c] sm:$0xf]
  %v20 = vld [vmem:[%s0 + $0x20] sm:$0xf]
  %v21 = vld [vmem:[%s0 + $0x24] sm:$0xf]
  %v22 = vld [vmem:[%s0 + $0x28] sm:$0xf]
  %v23 = vld [vmem:[%s0 + $0x2c] sm:$0xf]
  %v24 = vld [vmem:[%s0 + $0x30] sm:$0xf]
  %v25 = vld [vmem:[%s0 + $0x34] sm:$0xf]
  %v26 = vld [vmem:[%s0 + $0x38] sm:$0xf]
  %v27 = vld [vmem:[%s0 + $0x3c] sm:$0xf]
  %v28 = vld [vmem:[%s0 + $0x40] sm:$0xf]
  %v29 = vld [vmem:[%s0 + $0x44] sm:$0xf]
  %v30 = vld [vmem:[%s0 + $0x48] sm:$0xf]
  %v31 = vld [vmem:[%s0 + $0x4c] sm:$0xf]
  %v32 = vld [vmem:[%s0 + $0x50] sm:$0xf]
  %v33 = vld [vmem:[%s0 + $0x54] sm:$0xf]
  %v34 = vld [vmem:[%s0 + $0x58] sm:$0xf]
  %v35 = vld [vmem:[%s0 + $0x5c] sm:$0xf]
  %v36 = vld [vmem:[%s0 + $0x60] sm:$0xf]
  %v37 = vld [vmem:[%s0 + $0x64] sm:$0xf]
  %v38 = vld [vmem:[%s0 + $0x68] sm:$0xf]
  %v39 = vld [vmem:[%s0 + $0x6c] sm:$0xf]
  %v40 = vld [vmem:[%s0 + $0x70] sm:$0xf]
  %v41 = vld [vmem:[%s0 + $0x74] sm:$0xf]
  %v42 = vld [vmem:[%s0 + $0x78] sm:$0xf]
  %v43 = vld [vmem:[%s0 + $0x7c] sm:$0xf]
  %v44 = vld [vmem:[%s1] sm:$0xf]
  %v77 = vunpack.c.l.b16 %v12
  %v78 = vunpack.c.l.b16 %v13
  %v79 = vunpack.c.l.b16 %v14
  %v80 = vunpack.c.l.b16 %v15
  %v81 = vunpack.c.l.b16 %v16
  %v82 = vunpack.c.l.b16 %v17
  %v83 = vunpack.c.l.b16 %v18
  %v84 = vunpack.c.l.b16 %v19
  %v85 = vunpack.c.l.b16 %v20
  %v86 = vunpack.c.l.b16 %v21
  %v87 = vunpack.c.l.b16 %v22
  %v88 = vunpack.c.l.b16 %v23
  %v89 = vunpack.c.l.b16 %v24
  %v90 = vunpack.c.l.b16 %v25
  %v91 = vunpack.c.l.b16 %v26
  %v92 = vunpack.c.l.b16 %v27
  %v93 = vunpack.c.l.b16 %v28
  %v94 = vunpack.c.l.b16 %v29
  %v95 = vunpack.c.l.b16 %v30
  %v96 = vunpack.c.l.b16 %v31
  %v97 = vunpack.c.l.b16 %v32
  %v98 = vunpack.c.l.b16 %v33
  %v99 = vunpack.c.l.b16 %v34
  %v100 = vunpack.c.l.b16 %v35
  %v101 = vunpack.c.l.b16 %v36
  %v102 = vunpack.c.l.b16 %v37
  %v103 = vunpack.c.l.b16 %v38
  %v104 = vunpack.c.l.b16 %v39
  %v105 = vunpack.c.l.b16 %v40
  %v106 = vunpack.c.l.b16 %v41
  %v107 = vunpack.c.l.b16 %v42
  %v108 = vunpack.c.l.b16 %v43
  %v109 = vpack.c.b16 %v78, %v77
  %v110 = vpack.c.b16 %v80, %v79
  %v111 = vpack.c.b16 %v82, %v81
  %v112 = vpack.c.b16 %v84, %v83
  %v113 = vpack.c.b16 %v86, %v85
  %v114 = vpack.c.b16 %v88, %v87
  %v115 = vpack.c.b16 %v90, %v89
  %v116 = vpack.c.b16 %v92, %v91
  %v117 = vpack.c.b16 %v94, %v93
  %v118 = vpack.c.b16 %v96, %v95
  %v119 = vpack.c.b16 %v98, %v97
  %v120 = vpack.c.b16 %v100, %v99
  %v121 = vpack.c.b16 %v102, %v101
  %v122 = vpack.c.b16 %v104, %v103
  %v123 = vpack.c.b16 %v106, %v105
  %v124 = vpack.c.b16 %v108, %v107
  %vm125 = vcmask 64512
  %v127 = vsel %vm125, %v109, 0
  %v130 = vsel %vm125, %v110, 0
  %v133 = vsel %vm125, %v111, 0
  %v136 = vsel %vm125, %v112, 0
  %v139 = vsel %vm125, %v113, 0
  %v142 = vsel %vm125, %v114, 0
  %v145 = vsel %vm125, %v115, 0
  %v148 = vsel %vm125, %v116, 0
  %v151 = vsel %vm125, %v117, 0
  %v154 = vsel %vm125, %v118, 0
  %v157 = vsel %vm125, %v119, 0
  %v160 = vsel %vm125, %v120, 0
  %v163 = vsel %vm125, %v121, 0
  %v166 = vsel %vm125, %v122, 0
  %v169 = vsel %vm125, %v123, 0
  %v172 = vsel %vm125, %v124, 0
  %vm174 = vcmask 1043456
  %v176 = vsel %vm174, %v44, 0
  %178 = vmatpush.bf16.msra.mxu0 0
  %179 = vmatpush.bf16.msra.mxu0 0
  %180 = vmatpush.bf16.msra.mxu0 0
  %181 = vmatpush.bf16.msra.mxu0 0
  %182 = vmatpush.bf16.msra.mxu0 0
  %183 = vmatpush.bf16.msra.mxu0 0
  %184 = vmatpush.bf16.msra.mxu0 0
  %185 = vmatpush.bf16.msra.mxu0 %v176
  %186 = vmatmul.bf16.gmra.mxu0 %v127
  %v187 = vpop.f32.mrf.mxu0
  %v188 = vadd.f32 0.0, %v187
  %v189 = vpop.f32.mrf.mxu0
  %v190 = vadd.f32 0.0, %v189
  %191 = vmatmul.bf16.gmra.mxu0 %v130
  %v192 = vpop.f32.mrf.mxu0
  %v193 = vadd.f32 0.0, %v192
  %v194 = vpop.f32.mrf.mxu0
  %v195 = vadd.f32 0.0, %v194
  %196 = vmatmul.bf16.gmra.mxu0 %v133
  %v197 = vpop.f32.mrf.mxu0
  %v198 = vadd.f32 0.0, %v197
  %v199 = vpop.f32.mrf.mxu0
  %v200 = vadd.f32 0.0, %v199
  %201 = vmatmul.bf16.gmra.mxu0 %v136
  %v202 = vpop.f32.mrf.mxu0
  %v203 = vadd.f32 0.0, %v202
  %v204 = vpop.f32.mrf.mxu0
  %v205 = vadd.f32 0.0, %v204
  %206 = vmatmul.bf16.gmra.mxu0 %v139
  %v207 = vpop.f32.mrf.mxu0
  %v208 = vadd.f32 0.0, %v207
  %v209 = vpop.f32.mrf.mxu0
  %v210 = vadd.f32 0.0, %v209
  %211 = vmatmul.bf16.gmra.mxu0 %v142
  %v212 = vpop.f32.mrf.mxu0
  %v213 = vadd.f32 0.0, %v212
  %v214 = vpop.f32.mrf.mxu0
  %v215 = vadd.f32 0.0, %v214
  %216 = vmatmul.bf16.gmra.mxu0 %v145
  %v217 = vpop.f32.mrf.mxu0
  %v218 = vadd.f32 0.0, %v217
  %v219 = vpop.f32.mrf.mxu0
  %v220 = vadd.f32 0.0, %v219
  %221 = vmatmul.bf16.gmra.mxu0 %v148
  %v222 = vpop.f32.mrf.mxu0
  %v223 = vadd.f32 0.0, %v222
  %v224 = vpop.f32.mrf.mxu0
  %v225 = vadd.f32 0.0, %v224
  %226 = vmatmul.bf16.gmra.mxu0 %v151
  %v227 = vpop.f32.mrf.mxu0
  %v228 = vadd.f32 0.0, %v227
  %v229 = vpop.f32.mrf.mxu0
  %v230 = vadd.f32 0.0, %v229
  %231 = vmatmul.bf16.gmra.mxu0 %v154
  %v232 = vpop.f32.mrf.mxu0
  %v233 = vadd.f32 0.0, %v232
  %v234 = vpop.f32.mrf.mxu0
  %v235 = vadd.f32 0.0, %v234
  %236 = vmatmul.bf16.gmra.mxu0 %v157
  %v237 = vpop.f32.mrf.mxu0
  %v238 = vadd.f32 0.0, %v237
  %v239 = vpop.f32.mrf.mxu0
  %v240 = vadd.f32 0.0, %v239
  %241 = vmatmul.bf16.gmra.mxu0 %v160
  %v242 = vpop.f32.mrf.mxu0
  %v243 = vadd.f32 0.0, %v242
  %v244 = vpop.f32.mrf.mxu0
  %v245 = vadd.f32 0.0, %v244
  %246 = vmatmul.bf16.gmra.mxu0 %v163
  %v247 = vpop.f32.mrf.mxu0
  %v248 = vadd.f32 0.0, %v247
  %v249 = vpop.f32.mrf.mxu0
  %v250 = vadd.f32 0.0, %v249
  %251 = vmatmul.bf16.gmra.mxu0 %v166
  %v252 = vpop.f32.mrf.mxu0
  %v253 = vadd.f32 0.0, %v252
  %v254 = vpop.f32.mrf.mxu0
  %v255 = vadd.f32 0.0, %v254
  %256 = vmatmul.bf16.gmra.mxu0 %v169
  %v257 = vpop.f32.mrf.mxu0
  %v258 = vadd.f32 0.0, %v257
  %v259 = vpop.f32.mrf.mxu0
  %v260 = vadd.f32 0.0, %v259
  %261 = vmatmul.bf16.gmra.mxu0 %v172
  %v262 = vpop.f32.mrf.mxu0
  %v263 = vadd.f32 0.0, %v262
  %v264 = vpop.f32.mrf.mxu0
  %v265 = vadd.f32 0.0, %v264
  %266 = vdwg.mxu0
  %v267 = vpack.c.bf16 %v188, %v188
  %v268 = vpack.c.bf16 %v190, %v190
  %v269 = vpack.c.bf16 %v193, %v193
  %v270 = vpack.c.bf16 %v195, %v195
  %v271 = vpack.c.bf16 %v198, %v198
  %v272 = vpack.c.bf16 %v200, %v200
  %v273 = vpack.c.bf16 %v203, %v203
  %v274 = vpack.c.bf16 %v205, %v205
  %v275 = vpack.c.bf16 %v208, %v208
  %v276 = vpack.c.bf16 %v210, %v210
  %v277 = vpack.c.bf16 %v213, %v213
  %v278 = vpack.c.bf16 %v215, %v215
  %v279 = vpack.c.bf16 %v218, %v218
  %v280 = vpack.c.bf16 %v220, %v220
  %v281 = vpack.c.bf16 %v223, %v223
  %v282 = vpack.c.bf16 %v225, %v225
  %v283 = vpack.c.bf16 %v228, %v228
  %v284 = vpack.c.bf16 %v230, %v230
  %v285 = vpack.c.bf16 %v233, %v233
  %v286 = vpack.c.bf16 %v235, %v235
  %v287 = vpack.c.bf16 %v238, %v238
  %v288 = vpack.c.bf16 %v240, %v240
  %v289 = vpack.c.bf16 %v243, %v243
  %v290 = vpack.c.bf16 %v245, %v245
  %v291 = vpack.c.bf16 %v248, %v248
  %v292 = vpack.c.bf16 %v250, %v250
  %v293 = vpack.c.bf16 %v253, %v253
  %v294 = vpack.c.bf16 %v255, %v255
  %v295 = vpack.c.bf16 %v258, %v258
  %v296 = vpack.c.bf16 %v260, %v260
  %v297 = vpack.c.bf16 %v263, %v263
  %v298 = vpack.c.bf16 %v265, %v265
  %vm299 = vcmask 257024
  %300 = vst.msk [vmem:[%s2] sm:$0xf] %vm299, %v267
  %301 = vst.msk [vmem:[%s2 + $0x4] sm:$0xf] %vm299, %v268
  %302 = vst.msk [vmem:[%s2 + $0x8] sm:$0xf] %vm299, %v269
  %303 = vst.msk [vmem:[%s2 + $0xc] sm:$0xf] %vm299, %v270
  %304 = vst.msk [vmem:[%s2 + $0x10] sm:$0xf] %vm299, %v271
  %305 = vst.msk [vmem:[%s2 + $0x14] sm:$0xf] %vm299, %v272
  %306 = vst.msk [vmem:[%s2 + $0x18] sm:$0xf] %vm299, %v273
  %307 = vst.msk [vmem:[%s2 + $0x1c] sm:$0xf] %vm299, %v274
  %308 = vst.msk [vmem:[%s2 + $0x20] sm:$0xf] %vm299, %v275
  %309 = vst.msk [vmem:[%s2 + $0x24] sm:$0xf] %vm299, %v276
  %310 = vst.msk [vmem:[%s2 + $0x28] sm:$0xf] %vm299, %v277
  %311 = vst.msk [vmem:[%s2 + $0x2c] sm:$0xf] %vm299, %v278
  %312 = vst.msk [vmem:[%s2 + $0x30] sm:$0xf] %vm299, %v279
  %313 = vst.msk [vmem:[%s2 + $0x34] sm:$0xf] %vm299, %v280
  %314 = vst.msk [vmem:[%s2 + $0x38] sm:$0xf] %vm299, %v281
  %315 = vst.msk [vmem:[%s2 + $0x3c] sm:$0xf] %vm299, %v282
  %316 = vst.msk [vmem:[%s2 + $0x40] sm:$0xf] %vm299, %v283
  %317 = vst.msk [vmem:[%s2 + $0x44] sm:$0xf] %vm299, %v284
  %318 = vst.msk [vmem:[%s2 + $0x48] sm:$0xf] %vm299, %v285
  %319 = vst.msk [vmem:[%s2 + $0x4c] sm:$0xf] %vm299, %v286
  %320 = vst.msk [vmem:[%s2 + $0x50] sm:$0xf] %vm299, %v287
  %321 = vst.msk [vmem:[%s2 + $0x54] sm:$0xf] %vm299, %v288
  %322 = vst.msk [vmem:[%s2 + $0x58] sm:$0xf] %vm299, %v289
  %323 = vst.msk [vmem:[%s2 + $0x5c] sm:$0xf] %vm299, %v290
  %324 = vst.msk [vmem:[%s2 + $0x60] sm:$0xf] %vm299, %v291
  %325 = vst.msk [vmem:[%s2 + $0x64] sm:$0xf] %vm299, %v292
  %326 = vst.msk [vmem:[%s2 + $0x68] sm:$0xf] %vm299, %v293
  %327 = vst.msk [vmem:[%s2 + $0x6c] sm:$0xf] %vm299, %v294
  %328 = vst.msk [vmem:[%s2 + $0x70] sm:$0xf] %vm299, %v295
  %329 = vst.msk [vmem:[%s2 + $0x74] sm:$0xf] %vm299, %v296
  %330 = vst.msk [vmem:[%s2 + $0x78] sm:$0xf] %vm299, %v297
  %331 = vst.msk [vmem:[%s2 + $0x7c] sm:$0xf] %vm299, %v298
  // Predicated region
  $region10: #{gcn_forward.7} parent=0 // pred_check
    _
  $region11: #{gcn_forward.7} parent=0 // pred_check_branch
    %333 = sbr.rel (0) target = $region13
  $region12: #{gcn_forward.7} parent=0 // pred_region
    _
  $region13: #{gcn_forward.7} parent=0 // pred_fallthru
    _
  // Predicated region
  $region14: #{gcn_forward.7} parent=0 // pred_check
    _
  $region15: #{gcn_forward.7} parent=0 // pred_check_branch
    %335 = sbr.rel (0) target = $region17
  $region16: #{gcn_forward.7} parent=0 // pred_region
    _
  $region17: #{gcn_forward.7} parent=0 // pred_fallthru
    _

// kernel: gcn_forward.8
$region0: #{gcn_forward.8}
  #allocation0 [shape = 'u32[]', space=smem, size = 0x4, offset = 0x4, fixed_abs, tag = 'smem constant byte address 0x4 - core index']
  #allocation1 [shape = 'u32[72,128]{1,0:T(1,128)}', space=vmem, size = 0x9000, scoped, tag = 'internal scratch']
  #allocation2 [shape = 'f32[256,32]{1,0:T(8,128)}', space=vmem, size = 0x20000, scoped, tag = 'scratch operand']
  %s0 = inlined_call_operand.vmem [shape: bf16[256,256], index: 0, kind: input, shape index: {}]
  %s1 = inlined_call_operand.vmem [shape: bf16[256,32], index: 1, kind: input, shape index: {}]
  %s2 = inlined_call_operand.vmem [shape: f32[1,32], index: 2, kind: input, shape index: {}]
  %s3 = inlined_call_operand.vmem [shape: bf16[256,32], index: 3, kind: output, shape index: {}]
  %s4 = sld [smem:[#allocation0]]
  $region30: #{gcn_forward.8} parent=0
    _
  %s6 = ssub.s32 1, %s4
  %s7 = scalar_select 0, %s6, %s4
  // Predicated region
  $region2: #{gcn_forward.8} parent=0 // pred_check
    _
  $region3: #{gcn_forward.8} parent=0 // pred_check_branch
    %9 = sbr.rel (0) target = $region5
  $region4: #{gcn_forward.8} parent=0 // pred_region
    _
  $region5: #{gcn_forward.8} parent=0 // pred_fallthru
    _
  // Predicated region
  $region6: #{gcn_forward.8} parent=0 // pred_check
    _
  $region7: #{gcn_forward.8} parent=0 // pred_check_branch
    %11 = sbr.rel (0) target = $region9
  $region8: #{gcn_forward.8} parent=0 // pred_region
    _
  $region9: #{gcn_forward.8} parent=0 // pred_fallthru
    _
  // Predicated region
  $region10: #{gcn_forward.8} parent=0 // pred_check
    _
  $region11: #{gcn_forward.8} parent=0 // pred_check_branch
    %13 = sbr.rel (0) target = $region13
  $region12: #{gcn_forward.8} parent=0 // pred_region
    _
  $region13: #{gcn_forward.8} parent=0 // pred_fallthru
    _
  %p14 = scmp.eq.s32.totalorder 0, 0
  // Predicated region
  $region14: #{gcn_forward.8} parent=0 // pred_check
    %p15 = pneg %p14
  $region15: #{gcn_forward.8} parent=0 // pred_check_branch
    %17 = sbr.rel (%p15) target = $region17
  $region16: #{gcn_forward.8} parent=0 // pred_region
    %vm18 = vcmask 261120
    %19 = vst.msk [vmem:[#allocation2] sm:$0xff] %vm18, 0.0
    %20 = vst.msk [vmem:[#allocation2 + $0x8] sm:$0xff] %vm18, 0.0
    %21 = vst.msk [vmem:[#allocation2 + $0x10] sm:$0xff] %vm18, 0.0
    %22 = vst.msk [vmem:[#allocation2 + $0x18] sm:$0xff] %vm18, 0.0
    %23 = vst.msk [vmem:[#allocation2 + $0x20] sm:$0xff] %vm18, 0.0
    %24 = vst.msk [vmem:[#allocation2 + $0x28] sm:$0xff] %vm18, 0.0
    %25 = vst.msk [vmem:[#allocation2 + $0x30] sm:$0xff] %vm18, 0.0
    %26 = vst.msk [vmem:[#allocation2 + $0x38] sm:$0xff] %vm18, 0.0
    %27 = vst.msk [vmem:[#allocation2 + $0x40] sm:$0xff] %vm18, 0.0
    %28 = vst.msk [vmem:[#allocation2 + $0x48] sm:$0xff] %vm18, 0.0
    %29 = vst.msk [vmem:[#allocation2 + $0x50] sm:$0xff] %vm18, 0.0
    %30 = vst.msk [vmem:[#allocation2 + $0x58] sm:$0xff] %vm18, 0.0
    %31 = vst.msk [vmem:[#allocation2 + $0x60] sm:$0xff] %vm18, 0.0
    %32 = vst.msk [vmem:[#allocation2 + $0x68] sm:$0xff] %vm18, 0.0
    %33 = vst.msk [vmem:[#allocation2 + $0x70] sm:$0xff] %vm18, 0.0
    %34 = vst.msk [vmem:[#allocation2 + $0x78] sm:$0xff] %vm18, 0.0
    %35 = vst.msk [vmem:[#allocation2 + $0x80] sm:$0xff] %vm18, 0.0
    %36 = vst.msk [vmem:[#allocation2 + $0x88] sm:$0xff] %vm18, 0.0
    %37 = vst.msk [vmem:[#allocation2 + $0x90] sm:$0xff] %vm18, 0.0
    %38 = vst.msk [vmem:[#allocation2 + $0x98] sm:$0xff] %vm18, 0.0
    %39 = vst.msk [vmem:[#allocation2 + $0xa0] sm:$0xff] %vm18, 0.0
    %40 = vst.msk [vmem:[#allocation2 + $0xa8] sm:$0xff] %vm18, 0.0
    %41 = vst.msk [vmem:[#allocation2 + $0xb0] sm:$0xff] %vm18, 0.0
    %42 = vst.msk [vmem:[#allocation2 + $0xb8] sm:$0xff] %vm18, 0.0
    %43 = vst.msk [vmem:[#allocation2 + $0xc0] sm:$0xff] %vm18, 0.0
    %44 = vst.msk [vmem:[#allocation2 + $0xc8] sm:$0xff] %vm18, 0.0
    %45 = vst.msk [vmem:[#allocation2 + $0xd0] sm:$0xff] %vm18, 0.0
    %46 = vst.msk [vmem:[#allocation2 + $0xd8] sm:$0xff] %vm18, 0.0
    %47 = vst.msk [vmem:[#allocation2 + $0xe0] sm:$0xff] %vm18, 0.0
    %48 = vst.msk [vmem:[#allocation2 + $0xe8] sm:$0xff] %vm18, 0.0
    %49 = vst.msk [vmem:[#allocation2 + $0xf0] sm:$0xff] %vm18, 0.0
    %50 = vst.msk [vmem:[#allocation2 + $0xf8] sm:$0xff] %vm18, 0.0
  $region17: #{gcn_forward.8} parent=0 // pred_fallthru
    _
  %v51 = vld [vmem:[#allocation2] sm:$0xff]
  %v52 = vld [vmem:[#allocation2 + $0x8] sm:$0xff]
  %v53 = vld [vmem:[#allocation2 + $0x10] sm:$0xff]
  %v54 = vld [vmem:[#allocation2 + $0x18] sm:$0xff]
  %v55 = vld [vmem:[#allocation2 + $0x20] sm:$0xff]
  %v56 = vld [vmem:[#allocation2 + $0x28] sm:$0xff]
  %v57 = vld [vmem:[#allocation2 + $0x30] sm:$0xff]
  %v58 = vld [vmem:[#allocation2 + $0x38] sm:$0xff]
  %v59 = vld [vmem:[#allocation2 + $0x40] sm:$0xff]
  %v60 = vld [vmem:[#allocation2 + $0x48] sm:$0xff]
  %v61 = vld [vmem:[#allocation2 + $0x50] sm:$0xff]
  %v62 = vld [vmem:[#allocation2 + $0x58] sm:$0xff]
  %v63 = vld [vmem:[#allocation2 + $0x60] sm:$0xff]
  %v64 = vld [vmem:[#allocation2 + $0x68] sm:$0xff]
  %v65 = vld [vmem:[#allocation2 + $0x70] sm:$0xff]
  %v66 = vld [vmem:[#allocation2 + $0x78] sm:$0xff]
  %v67 = vld [vmem:[#allocation2 + $0x80] sm:$0xff]
  %v68 = vld [vmem:[#allocation2 + $0x88] sm:$0xff]
  %v69 = vld [vmem:[#allocation2 + $0x90] sm:$0xff]
  %v70 = vld [vmem:[#allocation2 + $0x98] sm:$0xff]
  %v71 = vld [vmem:[#allocation2 + $0xa0] sm:$0xff]
  %v72 = vld [vmem:[#allocation2 + $0xa8] sm:$0xff]
  %v73 = vld [vmem:[#allocation2 + $0xb0] sm:$0xff]
  %v74 = vld [vmem:[#allocation2 + $0xb8] sm:$0xff]
  %v75 = vld [vmem:[#allocation2 + $0xc0] sm:$0xff]
  %v76 = vld [vmem:[#allocation2 + $0xc8] sm:$0xff]
  %v77 = vld [vmem:[#allocation2 + $0xd0] sm:$0xff]
  %v78 = vld [vmem:[#allocation2 + $0xd8] sm:$0xff]
  %v79 = vld [vmem:[#allocation2 + $0xe0] sm:$0xff]
  %v80 = vld [vmem:[#allocation2 + $0xe8] sm:$0xff]
  %v81 = vld [vmem:[#allocation2 + $0xf0] sm:$0xff]
  %v82 = vld [vmem:[#allocation2 + $0xf8] sm:$0xff]
  %v83 = vld [vmem:[%s0] sm:$0xff]
  %v84 = vld [vmem:[%s0 + $0x8] sm:$0xff]
  %v85 = vld [vmem:[%s0 + $0x10] sm:$0xff]
  %v86 = vld [vmem:[%s0 + $0x18] sm:$0xff]
  %v87 = vld [vmem:[%s0 + $0x20] sm:$0xff]
  %v88 = vld [vmem:[%s0 + $0x28] sm:$0xff]
  %v89 = vld [vmem:[%s0 + $0x30] sm:$0xff]
  %v90 = vld [vmem:[%s0 + $0x38] sm:$0xff]
  %v91 = vld [vmem:[%s0 + $0x40] sm:$0xff]
  %v92 = vld [vmem:[%s0 + $0x48] sm:$0xff]
  %v93 = vld [vmem:[%s0 + $0x50] sm:$0xff]
  %v94 = vld [vmem:[%s0 + $0x58] sm:$0xff]
  %v95 = vld [vmem:[%s0 + $0x60] sm:$0xff]
  %v96 = vld [vmem:[%s0 + $0x68] sm:$0xff]
  %v97 = vld [vmem:[%s0 + $0x70] sm:$0xff]
  %v98 = vld [vmem:[%s0 + $0x78] sm:$0xff]
  %v99 = vld [vmem:[%s0 + $0x80] sm:$0xff]
  %v100 = vld [vmem:[%s0 + $0x88] sm:$0xff]
  %v101 = vld [vmem:[%s0 + $0x90] sm:$0xff]
  %v102 = vld [vmem:[%s0 + $0x98] sm:$0xff]
  %v103 = vld [vmem:[%s0 + $0xa0] sm:$0xff]
  %v104 = vld [vmem:[%s0 + $0xa8] sm:$0xff]
  %v105 = vld [vmem:[%s0 + $0xb0] sm:$0xff]
  %v106 = vld [vmem:[%s0 + $0xb8] sm:$0xff]
  %v107 = vld [vmem:[%s0 + $0xc0] sm:$0xff]
  %v108 = vld [vmem:[%s0 + $0xc8] sm:$0xff]
  %v109 = vld [vmem:[%s0 + $0xd0] sm:$0xff]
  %v110 = vld [vmem:[%s0 + $0xd8] sm:$0xff]
  %v111 = vld [vmem:[%s0 + $0xe0] sm:$0xff]
  %v112 = vld [vmem:[%s0 + $0xe8] sm:$0xff]
  %v113 = vld [vmem:[%s0 + $0xf0] sm:$0xff]
  %v114 = vld [vmem:[%s0 + $0xf8] sm:$0xff]
  %v115 = vld [vmem:[%s1] sm:$0xf]
  %v116 = vld [vmem:[%s1 + $0x4] sm:$0xf]
  %v117 = vld [vmem:[%s1 + $0x8] sm:$0xf]
  %v118 = vld [vmem:[%s1 + $0xc] sm:$0xf]
  %v119 = vld [vmem:[%s1 + $0x10] sm:$0xf]
  %v120 = vld [vmem:[%s1 + $0x14] sm:$0xf]
  %v121 = vld [vmem:[%s1 + $0x18] sm:$0xf]
  %v122 = vld [vmem:[%s1 + $0x1c] sm:$0xf]
  %v123 = vld [vmem:[%s1 + $0x20] sm:$0xf]
  %v124 = vld [vmem:[%s1 + $0x24] sm:$0xf]
  %v125 = vld [vmem:[%s1 + $0x28] sm:$0xf]
  %v126 = vld [vmem:[%s1 + $0x2c] sm:$0xf]
  %v127 = vld [vmem:[%s1 + $0x30] sm:$0xf]
  %v128 = vld [vmem:[%s1 + $0x34] sm:$0xf]
  %v129 = vld [vmem:[%s1 + $0x38] sm:$0xf]
  %v130 = vld [vmem:[%s1 + $0x3c] sm:$0xf]
  %v131 = vld [vmem:[%s1 + $0x40] sm:$0xf]
  %v132 = vld [vmem:[%s1 + $0x44] sm:$0xf]
  %v133 = vld [vmem:[%s1 + $0x48] sm:$0xf]
  %v134 = vld [vmem:[%s1 + $0x4c] sm:$0xf]
  %v135 = vld [vmem:[%s1 + $0x50] sm:$0xf]
  %v136 = vld [vmem:[%s1 + $0x54] sm:$0xf]
  %v137 = vld [vmem:[%s1 + $0x58] sm:$0xf]
  %v138 = vld [vmem:[%s1 + $0x5c] sm:$0xf]
  %v139 = vld [vmem:[%s1 + $0x60] sm:$0xf]
  %v140 = vld [vmem:[%s1 + $0x64] sm:$0xf]
  %v141 = vld [vmem:[%s1 + $0x68] sm:$0xf]
  %v142 = vld [vmem:[%s1 + $0x6c] sm:$0xf]
  %v143 = vld [vmem:[%s1 + $0x70] sm:$0xf]
  %v144 = vld [vmem:[%s1 + $0x74] sm:$0xf]
  %v145 = vld [vmem:[%s1 + $0x78] sm:$0xf]
  %v146 = vld [vmem:[%s1 + $0x7c] sm:$0xf]
  %v179 = vunpack.c.l.b16 %v83
  %v180 = vunpack.c.h.b16 %v83
  %v181 = vunpack.c.l.b16 %v84
  %v182 = vunpack.c.h.b16 %v84
  %v183 = vunpack.c.l.b16 %v85
  %v184 = vunpack.c.h.b16 %v85
  %v185 = vunpack.c.l.b16 %v86
  %v186 = vunpack.c.h.b16 %v86
  %v187 = vunpack.c.l.b16 %v87
  %v188 = vunpack.c.h.b16 %v87
  %v189 = vunpack.c.l.b16 %v88
  %v190 = vunpack.c.h.b16 %v88
  %v191 = vunpack.c.l.b16 %v89
  %v192 = vunpack.c.h.b16 %v89
  %v193 = vunpack.c.l.b16 %v90
  %v194 = vunpack.c.h.b16 %v90
  %v195 = vunpack.c.l.b16 %v91
  %v196 = vunpack.c.h.b16 %v91
  %v197 = vunpack.c.l.b16 %v92
  %v198 = vunpack.c.h.b16 %v92
  %v199 = vunpack.c.l.b16 %v93
  %v200 = vunpack.c.h.b16 %v93
  %v201 = vunpack.c.l.b16 %v94
  %v202 = vunpack.c.h.b16 %v94
  %v203 = vunpack.c.l.b16 %v95
  %v204 = vunpack.c.h.b16 %v95
  %v205 = vunpack.c.l.b16 %v96
  %v206 = vunpack.c.h.b16 %v96
  %v207 = vunpack.c.l.b16 %v97
  %v208 = vunpack.c.h.b16 %v97
  %v209 = vunpack.c.l.b16 %v98
  %v210 = vunpack.c.h.b16 %v98
  %v211 = vunpack.c.l.b16 %v99
  %v212 = vunpack.c.h.b16 %v99
  %v213 = vunpack.c.l.b16 %v100
  %v214 = vunpack.c.h.b16 %v100
  %v215 = vunpack.c.l.b16 %v101
  %v216 = vunpack.c.h.b16 %v101
  %v217 = vunpack.c.l.b16 %v102
  %v218 = vunpack.c.h.b16 %v102
  %v219 = vunpack.c.l.b16 %v103
  %v220 = vunpack.c.h.b16 %v103
  %v221 = vunpack.c.l.b16 %v104
  %v222 = vunpack.c.h.b16 %v104
  %v223 = vunpack.c.l.b16 %v105
  %v224 = vunpack.c.h.b16 %v105
  %v225 = vunpack.c.l.b16 %v106
  %v226 = vunpack.c.h.b16 %v106
  %v227 = vunpack.c.l.b16 %v107
  %v228 = vunpack.c.h.b16 %v107
  %v229 = vunpack.c.l.b16 %v108
  %v230 = vunpack.c.h.b16 %v108
  %v231 = vunpack.c.l.b16 %v109
  %v232 = vunpack.c.h.b16 %v109
  %v233 = vunpack.c.l.b16 %v110
  %v234 = vunpack.c.h.b16 %v110
  %v235 = vunpack.c.l.b16 %v111
  %v236 = vunpack.c.h.b16 %v111
  %v237 = vunpack.c.l.b16 %v112
  %v238 = vunpack.c.h.b16 %v112
  %v239 = vunpack.c.l.b16 %v113
  %v240 = vunpack.c.h.b16 %v113
  %v241 = vunpack.c.l.b16 %v114
  %v242 = vunpack.c.h.b16 %v114
  %v243 = vpack.c.b16 %v181, %v179
  %v244 = vpack.c.b16 %v182, %v180
  %v245 = vpack.c.b16 %v185, %v183
  %v246 = vpack.c.b16 %v186, %v184
  %v247 = vpack.c.b16 %v189, %v187
  %v248 = vpack.c.b16 %v190, %v188
  %v249 = vpack.c.b16 %v193, %v191
  %v250 = vpack.c.b16 %v194, %v192
  %v251 = vpack.c.b16 %v197, %v195
  %v252 = vpack.c.b16 %v198, %v196
  %v253 = vpack.c.b16 %v201, %v199
  %v254 = vpack.c.b16 %v202, %v200
  %v255 = vpack.c.b16 %v205, %v203
  %v256 = vpack.c.b16 %v206, %v204
  %v257 = vpack.c.b16 %v209, %v207
  %v258 = vpack.c.b16 %v210, %v208
  %v259 = vpack.c.b16 %v213, %v211
  %v260 = vpack.c.b16 %v214, %v212
  %v261 = vpack.c.b16 %v217, %v215
  %v262 = vpack.c.b16 %v218, %v216
  %v263 = vpack.c.b16 %v221, %v219
  %v264 = vpack.c.b16 %v222, %v220
  %v265 = vpack.c.b16 %v225, %v223
  %v266 = vpack.c.b16 %v226, %v224
  %v267 = vpack.c.b16 %v229, %v227
  %v268 = vpack.c.b16 %v230, %v228
  %v269 = vpack.c.b16 %v233, %v231
  %v270 = vpack.c.b16 %v234, %v232
  %v271 = vpack.c.b16 %v237, %v235
  %v272 = vpack.c.b16 %v238, %v236
  %v273 = vpack.c.b16 %v241, %v239
  %v274 = vpack.c.b16 %v242, %v240
  %v339 = vunpack.c.l.b16 %v115
  %v340 = vunpack.c.l.b16 %v116
  %v341 = vunpack.c.l.b16 %v117
  %v342 = vunpack.c.l.b16 %v118
  %v343 = vunpack.c.l.b16 %v119
  %v344 = vunpack.c.l.b16 %v120
  %v345 = vunpack.c.l.b16 %v121
  %v346 = vunpack.c.l.b16 %v122
  %v347 = vunpack.c.l.b16 %v123
  %v348 = vunpack.c.l.b16 %v124
  %v349 = vunpack.c.l.b16 %v125
  %v350 = vunpack.c.l.b16 %v126
  %v351 = vunpack.c.l.b16 %v127
  %v352 = vunpack.c.l.b16 %v128
  %v353 = vunpack.c.l.b16 %v129
  %v354 = vunpack.c.l.b16 %v130
  %v355 = vunpack.c.l.b16 %v131
  %v356 = vunpack.c.l.b16 %v132
  %v357 = vunpack.c.l.b16 %v133
  %v358 = vunpack.c.l.b16 %v134
  %v359 = vunpack.c.l.b16 %v135
  %v360 = vunpack.c.l.b16 %v136
  %v361 = vunpack.c.l.b16 %v137
  %v362 = vunpack.c.l.b16 %v138
  %v363 = vunpack.c.l.b16 %v139
  %v364 = vunpack.c.l.b16 %v140
  %v365 = vunpack.c.l.b16 %v141
  %v366 = vunpack.c.l.b16 %v142
  %v367 = vunpack.c.l.b16 %v143
  %v368 = vunpack.c.l.b16 %v144
  %v369 = vunpack.c.l.b16 %v145
  %v370 = vunpack.c.l.b16 %v146
  %v371 = vpack.c.b16 %v340, %v339
  %v372 = vpack.c.b16 %v342, %v341
  %v373 = vpack.c.b16 %v344, %v343
  %v374 = vpack.c.b16 %v346, %v345
  %v375 = vpack.c.b16 %v348, %v347
  %v376 = vpack.c.b16 %v350, %v349
  %v377 = vpack.c.b16 %v352, %v351
  %v378 = vpack.c.b16 %v354, %v353
  %v379 = vpack.c.b16 %v356, %v355
  %v380 = vpack.c.b16 %v358, %v357
  %v381 = vpack.c.b16 %v360, %v359
  %v382 = vpack.c.b16 %v362, %v361
  %v383 = vpack.c.b16 %v364, %v363
  %v384 = vpack.c.b16 %v366, %v365
  %v385 = vpack.c.b16 %v368, %v367
  %v386 = vpack.c.b16 %v370, %v369
  %403 = vmatpush.bf16.msra.mxu0 %v378
  %404 = vmatpush.bf16.msra.mxu0 %v377
  %405 = vmatpush.bf16.msra.mxu0 %v376
  %406 = vmatpush.bf16.msra.mxu0 %v375
  %407 = vmatpush.bf16.msra.mxu0 %v374
  %408 = vmatpush.bf16.msra.mxu0 %v373
  %409 = vmatpush.bf16.msra.mxu0 %v372
  %410 = vmatpush.bf16.msra.mxu0 %v371
  %411 = vmatmul.bf16.gmra.mxu0 %v243
  %v412 = vpop.f32.mrf.mxu0
  %v413 = vadd.f32 0.0, %v412
  %v414 = vpop.f32.mrf.mxu0
  %v415 = vadd.f32 0.0, %v414
  %416 = vmatmul.bf16.gmra.mxu0 %v245
  %v417 = vpop.f32.mrf.mxu0
  %v418 = vadd.f32 0.0, %v417
  %v419 = vpop.f32.mrf.mxu0
  %v420 = vadd.f32 0.0, %v419
  %421 = vmatmul.bf16.gmra.mxu0 %v247
  %v422 = vpop.f32.mrf.mxu0
  %v423 = vadd.f32 0.0, %v422
  %v424 = vpop.f32.mrf.mxu0
  %v425 = vadd.f32 0.0, %v424
  %426 = vmatmul.bf16.gmra.mxu0 %v249
  %v427 = vpop.f32.mrf.mxu0
  %v428 = vadd.f32 0.0, %v427
  %v429 = vpop.f32.mrf.mxu0
  %v430 = vadd.f32 0.0, %v429
  %431 = vmatmul.bf16.gmra.mxu0 %v251
  %v432 = vpop.f32.mrf.mxu0
  %v433 = vadd.f32 0.0, %v432
  %v434 = vpop.f32.mrf.mxu0
  %v435 = vadd.f32 0.0, %v434
  %436 = vmatmul.bf16.gmra.mxu0 %v253
  %v437 = vpop.f32.mrf.mxu0
  %v438 = vadd.f32 0.0, %v437
  %v439 = vpop.f32.mrf.mxu0
  %v440 = vadd.f32 0.0, %v439
  %441 = vmatmul.bf16.gmra.mxu0 %v255
  %v442 = vpop.f32.mrf.mxu0
  %v443 = vadd.f32 0.0, %v442
  %v444 = vpop.f32.mrf.mxu0
  %v445 = vadd.f32 0.0, %v444
  %446 = vmatmul.bf16.gmra.mxu0 %v257
  %v447 = vpop.f32.mrf.mxu0
  %v448 = vadd.f32 0.0, %v447
  %v449 = vpop.f32.mrf.mxu0
  %v450 = vadd.f32 0.0, %v449
  %451 = vmatmul.bf16.gmra.mxu0 %v259
  %v452 = vpop.f32.mrf.mxu0
  %v453 = vadd.f32 0.0, %v452
  %v454 = vpop.f32.mrf.mxu0
  %v455 = vadd.f32 0.0, %v454
  %456 = vmatmul.bf16.gmra.mxu0 %v261
  %v457 = vpop.f32.mrf.mxu0
  %v458 = vadd.f32 0.0, %v457
  %v459 = vpop.f32.mrf.mxu0
  %v460 = vadd.f32 0.0, %v459
  %461 = vmatmul.bf16.gmra.mxu0 %v263
  %v462 = vpop.f32.mrf.mxu0
  %v463 = vadd.f32 0.0, %v462
  %v464 = vpop.f32.mrf.mxu0
  %v465 = vadd.f32 0.0, %v464
  %466 = vmatmul.bf16.gmra.mxu0 %v265
  %v467 = vpop.f32.mrf.mxu0
  %v468 = vadd.f32 0.0, %v467
  %v469 = vpop.f32.mrf.mxu0
  %v470 = vadd.f32 0.0, %v469
  %471 = vmatmul.bf16.gmra.mxu0 %v267
  %v472 = vpop.f32.mrf.mxu0
  %v473 = vadd.f32 0.0, %v472
  %v474 = vpop.f32.mrf.mxu0
  %v475 = vadd.f32 0.0, %v474
  %476 = vmatmul.bf16.gmra.mxu0 %v269
  %v477 = vpop.f32.mrf.mxu0
  %v478 = vadd.f32 0.0, %v477
  %v479 = vpop.f32.mrf.mxu0
  %v480 = vadd.f32 0.0, %v479
  %481 = vmatmul.bf16.gmra.mxu0 %v271
  %v482 = vpop.f32.mrf.mxu0
  %v483 = vadd.f32 0.0, %v482
  %v484 = vpop.f32.mrf.mxu0
  %v485 = vadd.f32 0.0, %v484
  %486 = vmatmul.bf16.gmra.mxu0 %v273
  %v487 = vpop.f32.mrf.mxu0
  %v488 = vadd.f32 0.0, %v487
  %v489 = vpop.f32.mrf.mxu0
  %v490 = vadd.f32 0.0, %v489
  %491 = vdwg.mxu0
  %492 = vmatpush.bf16.msra.mxu0 %v386
  %493 = vmatpush.bf16.msra.mxu0 %v385
  %494 = vmatpush.bf16.msra.mxu0 %v384
  %495 = vmatpush.bf16.msra.mxu0 %v383
  %496 = vmatpush.bf16.msra.mxu0 %v382
  %497 = vmatpush.bf16.msra.mxu0 %v381
  %498 = vmatpush.bf16.msra.mxu0 %v380
  %499 = vmatpush.bf16.msra.mxu0 %v379
  %500 = vmatmul.bf16.gmra.mxu0 %v244
  %v501 = vpop.f32.mrf.mxu0
  %v502 = vadd.f32 %v413, %v501
  %v503 = vpop.f32.mrf.mxu0
  %v504 = vadd.f32 %v415, %v503
  %505 = vmatmul.bf16.gmra.mxu0 %v246
  %v506 = vpop.f32.mrf.mxu0
  %v507 = vadd.f32 %v418, %v506
  %v508 = vpop.f32.mrf.mxu0
  %v509 = vadd.f32 %v420, %v508
  %510 = vmatmul.bf16.gmra.mxu0 %v248
  %v511 = vpop.f32.mrf.mxu0
  %v512 = vadd.f32 %v423, %v511
  %v513 = vpop.f32.mrf.mxu0
  %v514 = vadd.f32 %v425, %v513
  %515 = vmatmul.bf16.gmra.mxu0 %v250
  %v516 = vpop.f32.mrf.mxu0
  %v517 = vadd.f32 %v428, %v516
  %v518 = vpop.f32.mrf.mxu0
  %v519 = vadd.f32 %v430, %v518
  %520 = vmatmul.bf16.gmra.mxu0 %v252
  %v521 = vpop.f32.mrf.mxu0
  %v522 = vadd.f32 %v433, %v521
  %v523 = vpop.f32.mrf.mxu0
  %v524 = vadd.f32 %v435, %v523
  %525 = vmatmul.bf16.gmra.mxu0 %v254
  %v526 = vpop.f32.mrf.mxu0
  %v527 = vadd.f32 %v438, %v526
  %v528 = vpop.f32.mrf.mxu0
  %v529 = vadd.f32 %v440, %v528
  %530 = vmatmul.bf16.gmra.mxu0 %v256
  %v531 = vpop.f32.mrf.mxu0
  %v532 = vadd.f32 %v443, %v531
  %v533 = vpop.f32.mrf.mxu0
  %v534 = vadd.f32 %v445, %v533
  %535 = vmatmul.bf16.gmra.mxu0 %v258
  %v536 = vpop.f32.mrf.mxu0
  %v537 = vadd.f32 %v448, %v536
  %v538 = vpop.f32.mrf.mxu0
  %v539 = vadd.f32 %v450, %v538
  %540 = vmatmul.bf16.gmra.mxu0 %v260
  %v541 = vpop.f32.mrf.mxu0
  %v542 = vadd.f32 %v453, %v541
  %v543 = vpop.f32.mrf.mxu0
  %v544 = vadd.f32 %v455, %v543
  %545 = vmatmul.bf16.gmra.mxu0 %v262
  %v546 = vpop.f32.mrf.mxu0
  %v547 = vadd.f32 %v458, %v546
  %v548 = vpop.f32.mrf.mxu0
  %v549 = vadd.f32 %v460, %v548
  %550 = vmatmul.bf16.gmra.mxu0 %v264
  %v551 = vpop.f32.mrf.mxu0
  %v552 = vadd.f32 %v463, %v551
  %v553 = vpop.f32.mrf.mxu0
  %v554 = vadd.f32 %v465, %v553
  %555 = vmatmul.bf16.gmra.mxu0 %v266
  %v556 = vpop.f32.mrf.mxu0
  %v557 = vadd.f32 %v468, %v556
  %v558 = vpop.f32.mrf.mxu0
  %v559 = vadd.f32 %v470, %v558
  %560 = vmatmul.bf16.gmra.mxu0 %v268
  %v561 = vpop.f32.mrf.mxu0
  %v562 = vadd.f32 %v473, %v561
  %v563 = vpop.f32.mrf.mxu0
  %v564 = vadd.f32 %v475, %v563
  %565 = vmatmul.bf16.gmra.mxu0 %v270
  %v566 = vpop.f32.mrf.mxu0
  %v567 = vadd.f32 %v478, %v566
  %v568 = vpop.f32.mrf.mxu0
  %v569 = vadd.f32 %v480, %v568
  %570 = vmatmul.bf16.gmra.mxu0 %v272
  %v571 = vpop.f32.mrf.mxu0
  %v572 = vadd.f32 %v483, %v571
  %v573 = vpop.f32.mrf.mxu0
  %v574 = vadd.f32 %v485, %v573
  %575 = vmatmul.bf16.gmra.mxu0 %v274
  %v576 = vpop.f32.mrf.mxu0
  %v577 = vadd.f32 %v488, %v576
  %v578 = vpop.f32.mrf.mxu0
  %v579 = vadd.f32 %v490, %v578
  %580 = vdwg.mxu0
  %v581 = vadd.f32 %v51, %v502
  %v582 = vadd.f32 %v52, %v504
  %v583 = vadd.f32 %v53, %v507
  %v584 = vadd.f32 %v54, %v509
  %v585 = vadd.f32 %v55, %v512
  %v586 = vadd.f32 %v56, %v514
  %v587 = vadd.f32 %v57, %v517
  %v588 = vadd.f32 %v58, %v519
  %v589 = vadd.f32 %v59, %v522
  %v590 = vadd.f32 %v60, %v524
  %v591 = vadd.f32 %v61, %v527
  %v592 = vadd.f32 %v62, %v529
  %v593 = vadd.f32 %v63, %v532
  %v594 = vadd.f32 %v64, %v534
  %v595 = vadd.f32 %v65, %v537
  %v596 = vadd.f32 %v66, %v539
  %v597 = vadd.f32 %v67, %v542
  %v598 = vadd.f32 %v68, %v544
  %v599 = vadd.f32 %v69, %v547
  %v600 = vadd.f32 %v70, %v549
  %v601 = vadd.f32 %v71, %v552
  %v602 = vadd.f32 %v72, %v554
  %v603 = vadd.f32 %v73, %v557
  %v604 = vadd.f32 %v74, %v559
  %v605 = vadd.f32 %v75, %v562
  %v606 = vadd.f32 %v76, %v564
  %v607 = vadd.f32 %v77, %v567
  %v608 = vadd.f32 %v78, %v569
  %v609 = vadd.f32 %v79, %v572
  %v610 = vadd.f32 %v80, %v574
  %v611 = vadd.f32 %v81, %v577
  %v612 = vadd.f32 %v82, %v579
  %vm613 = vcmask 261120
  %614 = vst.msk [vmem:[#allocation2] sm:$0xff] %vm613, %v581
  %615 = vst.msk [vmem:[#allocation2 + $0x8] sm:$0xff] %vm613, %v582
  %616 = vst.msk [vmem:[#allocation2 + $0x10] sm:$0xff] %vm613, %v583
  %617 = vst.msk [vmem:[#allocation2 + $0x18] sm:$0xff] %vm613, %v584
  %618 = vst.msk [vmem:[#allocation2 + $0x20] sm:$0xff] %vm613, %v585
  %619 = vst.msk [vmem:[#allocation2 + $0x28] sm:$0xff] %vm613, %v586
  %620 = vst.msk [vmem:[#allocation2 + $0x30] sm:$0xff] %vm613, %v587
  %621 = vst.msk [vmem:[#allocation2 + $0x38] sm:$0xff] %vm613, %v588
  %622 = vst.msk [vmem:[#allocation2 + $0x40] sm:$0xff] %vm613, %v589
  %623 = vst.msk [vmem:[#allocation2 + $0x48] sm:$0xff] %vm613, %v590
  %624 = vst.msk [vmem:[#allocation2 + $0x50] sm:$0xff] %vm613, %v591
  %625 = vst.msk [vmem:[#allocation2 + $0x58] sm:$0xff] %vm613, %v592
  %626 = vst.msk [vmem:[#allocation2 + $0x60] sm:$0xff] %vm613, %v593
  %627 = vst.msk [vmem:[#allocation2 + $0x68] sm:$0xff] %vm613, %v594
  %628 = vst.msk [vmem:[#allocation2 + $0x70] sm:$0xff] %vm613, %v595
  %629 = vst.msk [vmem:[#allocation2 + $0x78] sm:$0xff] %vm613, %v596
  %630 = vst.msk [vmem:[#allocation2 + $0x80] sm:$0xff] %vm613, %v597
  %631 = vst.msk [vmem:[#allocation2 + $0x88] sm:$0xff] %vm613, %v598
  %632 = vst.msk [vmem:[#allocation2 + $0x90] sm:$0xff] %vm613, %v599
  %633 = vst.msk [vmem:[#allocation2 + $0x98] sm:$0xff] %vm613, %v600
  %634 = vst.msk [vmem:[#allocation2 + $0xa0] sm:$0xff] %vm613, %v601
  %635 = vst.msk [vmem:[#allocation2 + $0xa8] sm:$0xff] %vm613, %v602
  %636 = vst.msk [vmem:[#allocation2 + $0xb0] sm:$0xff] %vm613, %v603
  %637 = vst.msk [vmem:[#allocation2 + $0xb8] sm:$0xff] %vm613, %v604
  %638 = vst.msk [vmem:[#allocation2 + $0xc0] sm:$0xff] %vm613, %v605
  %639 = vst.msk [vmem:[#allocation2 + $0xc8] sm:$0xff] %vm613, %v606
  %640 = vst.msk [vmem:[#allocation2 + $0xd0] sm:$0xff] %vm613, %v607
  %641 = vst.msk [vmem:[#allocation2 + $0xd8] sm:$0xff] %vm613, %v608
  %642 = vst.msk [vmem:[#allocation2 + $0xe0] sm:$0xff] %vm613, %v609
  %643 = vst.msk [vmem:[#allocation2 + $0xe8] sm:$0xff] %vm613, %v610
  %644 = vst.msk [vmem:[#allocation2 + $0xf0] sm:$0xff] %vm613, %v611
  %645 = vst.msk [vmem:[#allocation2 + $0xf8] sm:$0xff] %vm613, %v612
  // Predicated region
  $region18: #{gcn_forward.8} parent=0 // pred_check
    %p646 = pneg %p14
  $region19: #{gcn_forward.8} parent=0 // pred_check_branch
    %648 = sbr.rel (%p646) target = $region21
  $region20: #{gcn_forward.8} parent=0 // pred_region
    %v649 = vld [vmem:[#allocation2] sm:$0xff]
    %v650 = vld [vmem:[#allocation2 + $0x8] sm:$0xff]
    %v651 = vld [vmem:[#allocation2 + $0x10] sm:$0xff]
    %v652 = vld [vmem:[#allocation2 + $0x18] sm:$0xff]
    %v653 = vld [vmem:[#allocation2 + $0x20] sm:$0xff]
    %v654 = vld [vmem:[#allocation2 + $0x28] sm:$0xff]
    %v655 = vld [vmem:[#allocation2 + $0x30] sm:$0xff]
    %v656 = vld [vmem:[#allocation2 + $0x38] sm:$0xff]
    %v657 = vld [vmem:[#allocation2 + $0x40] sm:$0xff]
    %v658 = vld [vmem:[#allocation2 + $0x48] sm:$0xff]
    %v659 = vld [vmem:[#allocation2 + $0x50] sm:$0xff]
    %v660 = vld [vmem:[#allocation2 + $0x58] sm:$0xff]
    %v661 = vld [vmem:[#allocation2 + $0x60] sm:$0xff]
    %v662 = vld [vmem:[#allocation2 + $0x68] sm:$0xff]
    %v663 = vld [vmem:[#allocation2 + $0x70] sm:$0xff]
    %v664 = vld [vmem:[#allocation2 + $0x78] sm:$0xff]
    %v665 = vld [vmem:[#allocation2 + $0x80] sm:$0xff]
    %v666 = vld [vmem:[#allocation2 + $0x88] sm:$0xff]
    %v667 = vld [vmem:[#allocation2 + $0x90] sm:$0xff]
    %v668 = vld [vmem:[#allocation2 + $0x98] sm:$0xff]
    %v669 = vld [vmem:[#allocation2 + $0xa0] sm:$0xff]
    %v670 = vld [vmem:[#allocation2 + $0xa8] sm:$0xff]
    %v671 = vld [vmem:[#allocation2 + $0xb0] sm:$0xff]
    %v672 = vld [vmem:[#allocation2 + $0xb8] sm:$0xff]
    %v673 = vld [vmem:[#allocation2 + $0xc0] sm:$0xff]
    %v674 = vld [vmem:[#allocation2 + $0xc8] sm:$0xff]
    %v675 = vld [vmem:[#allocation2 + $0xd0] sm:$0xff]
    %v676 = vld [vmem:[#allocation2 + $0xd8] sm:$0xff]
    %v677 = vld [vmem:[#allocation2 + $0xe0] sm:$0xff]
    %v678 = vld [vmem:[#allocation2 + $0xe8] sm:$0xff]
    %v679 = vld [vmem:[#allocation2 + $0xf0] sm:$0xff]
    %v680 = vld [vmem:[#allocation2 + $0xf8] sm:$0xff]
    %v681 = vld [vmem:[%s2] sm:$0x1]
    %v683 = vperm.slane %v681, 0
    %v685 = vadd.f32 %v649, %v683
    %v686 = vadd.f32 %v650, %v683
    %v687 = vadd.f32 %v651, %v683
    %v688 = vadd.f32 %v652, %v683
    %v689 = vadd.f32 %v653, %v683
    %v690 = vadd.f32 %v654, %v683
    %v691 = vadd.f32 %v655, %v683
    %v692 = vadd.f32 %v656, %v683
    %v693 = vadd.f32 %v657, %v683
    %v694 = vadd.f32 %v658, %v683
    %v695 = vadd.f32 %v659, %v683
    %v696 = vadd.f32 %v660, %v683
    %v697 = vadd.f32 %v661, %v683
    %v698 = vadd.f32 %v662, %v683
    %v699 = vadd.f32 %v663, %v683
    %v700 = vadd.f32 %v664, %v683
    %v701 = vadd.f32 %v665, %v683
    %v702 = vadd.f32 %v666, %v683
    %v703 = vadd.f32 %v667, %v683
    %v704 = vadd.f32 %v668, %v683
    %v705 = vadd.f32 %v669, %v683
    %v706 = vadd.f32 %v670, %v683
    %v707 = vadd.f32 %v671, %v683
    %v708 = vadd.f32 %v672, %v683
    %v709 = vadd.f32 %v673, %v683
    %v710 = vadd.f32 %v674, %v683
    %v711 = vadd.f32 %v675, %v683
    %v712 = vadd.f32 %v676, %v683
    %v713 = vadd.f32 %v677, %v683
    %v714 = vadd.f32 %v678, %v683
    %v715 = vadd.f32 %v679, %v683
    %v716 = vadd.f32 %v680, %v683
    %v717 = vmax.f32 %v685, 0.0
    %v718 = vmax.f32 %v686, 0.0
    %v719 = vmax.f32 %v687, 0.0
    %v720 = vmax.f32 %v688, 0.0
    %v721 = vmax.f32 %v689, 0.0
    %v722 = vmax.f32 %v690, 0.0
    %v723 = vmax.f32 %v691, 0.0
    %v724 = vmax.f32 %v692, 0.0
    %v725 = vmax.f32 %v693, 0.0
    %v726 = vmax.f32 %v694, 0.0
    %v727 = vmax.f32 %v695, 0.0
    %v728 = vmax.f32 %v696, 0.0
    %v729 = vmax.f32 %v697, 0.0
    %v730 = vmax.f32 %v698, 0.0
    %v731 = vmax.f32 %v699, 0.0
    %v732 = vmax.f32 %v700, 0.0
    %v733 = vmax.f32 %v701, 0.0
    %v734 = vmax.f32 %v702, 0.0
    %v735 = vmax.f32 %v703, 0.0
    %v736 = vmax.f32 %v704, 0.0
    %v737 = vmax.f32 %v705, 0.0
    %v738 = vmax.f32 %v706, 0.0
    %v739 = vmax.f32 %v707, 0.0
    %v740 = vmax.f32 %v708, 0.0
    %v741 = vmax.f32 %v709, 0.0
    %v742 = vmax.f32 %v710, 0.0
    %v743 = vmax.f32 %v711, 0.0
    %v744 = vmax.f32 %v712, 0.0
    %v745 = vmax.f32 %v713, 0.0
    %v746 = vmax.f32 %v714, 0.0
    %v747 = vmax.f32 %v715, 0.0
    %v748 = vmax.f32 %v716, 0.0
    %v749 = vpack.c.bf16 %v717, %v717
    %v750 = vpack.c.bf16 %v718, %v718
    %v751 = vpack.c.bf16 %v719, %v719
    %v752 = vpack.c.bf16 %v720, %v720
    %v753 = vpack.c.bf16 %v721, %v721
    %v754 = vpack.c.bf16 %v722, %v722
    %v755 = vpack.c.bf16 %v723, %v723
    %v756 = vpack.c.bf16 %v724, %v724
    %v757 = vpack.c.bf16 %v725, %v725
    %v758 = vpack.c.bf16 %v726, %v726
    %v759 = vpack.c.bf16 %v727, %v727
    %v760 = vpack.c.bf16 %v728, %v728
    %v761 = vpack.c.bf16 %v729, %v729
    %v762 = vpack.c.bf16 %v730, %v730
    %v763 = vpack.c.bf16 %v731, %v731
    %v764 = vpack.c.bf16 %v732, %v732
    %v765 = vpack.c.bf16 %v733, %v733
    %v766 = vpack.c.bf16 %v734, %v734
    %v767 = vpack.c.bf16 %v735, %v735
    %v768 = vpack.c.bf16 %v736, %v736
    %v769 = vpack.c.bf16 %v737, %v737
    %v770 = vpack.c.bf16 %v738, %v738
    %v771 = vpack.c.bf16 %v739, %v739
    %v772 = vpack.c.bf16 %v740, %v740
    %v773 = vpack.c.bf16 %v741, %v741
    %v774 = vpack.c.bf16 %v742, %v742
    %v775 = vpack.c.bf16 %v743, %v743
    %v776 = vpack.c.bf16 %v744, %v744
    %v777 = vpack.c.bf16 %v745, %v745
    %v778 = vpack.c.bf16 %v746, %v746
    %v779 = vpack.c.bf16 %v747, %v747
    %v780 = vpack.c.bf16 %v748, %v748
    %vm781 = vcmask 257024
    %782 = vst.msk [vmem:[%s3] sm:$0xf] %vm781, %v749
    %783 = vst.msk [vmem:[%s3 + $0x4] sm:$0xf] %vm781, %v750
    %784 = vst.msk [vmem:[%s3 + $0x8] sm:$0xf] %vm781, %v751
    %785 = vst.msk [vmem:[%s3 + $0xc] sm:$0xf] %vm781, %v752
    %786 = vst.msk [vmem:[%s3 + $0x10] sm:$0xf] %vm781, %v753
    %787 = vst.msk [vmem:[%s3 + $0x14] sm:$0xf] %vm781, %v754
    %788 = vst.msk [vmem:[%s3 + $0x18] sm:$0xf] %vm781, %v755
    %789 = vst.msk [vmem:[%s3 + $0x1c] sm:$0xf] %vm781, %v756
    %790 = vst.msk [vmem:[%s3 + $0x20] sm:$0xf] %vm781, %v757
    %791 = vst.msk [vmem:[%s3 + $0x24] sm:$0xf] %vm781, %v758
    %792 = vst.msk [vmem:[%s3 + $0x28] sm:$0xf] %vm781, %v759
    %793 = vst.msk [vmem:[%s3 + $0x2c] sm:$0xf] %vm781, %v760
    %794 = vst.msk [vmem:[%s3 + $0x30] sm:$0xf] %vm781, %v761
    %795 = vst.msk [vmem:[%s3 + $0x34] sm:$0xf] %vm781, %v762
    %796 = vst.msk [vmem:[%s3 + $0x38] sm:$0xf] %vm781, %v763
    %797 = vst.msk [vmem:[%s3 + $0x3c] sm:$0xf] %vm781, %v764
    %798 = vst.msk [vmem:[%s3 + $0x40] sm:$0xf] %vm781, %v765
    %799 = vst.msk [vmem:[%s3 + $0x44] sm:$0xf] %vm781, %v766
    %800 = vst.msk [vmem:[%s3 + $0x48] sm:$0xf] %vm781, %v767
    %801 = vst.msk [vmem:[%s3 + $0x4c] sm:$0xf] %vm781, %v768
    %802 = vst.msk [vmem:[%s3 + $0x50] sm:$0xf] %vm781, %v769
    %803 = vst.msk [vmem:[%s3 + $0x54] sm:$0xf] %vm781, %v770
    %804 = vst.msk [vmem:[%s3 + $0x58] sm:$0xf] %vm781, %v771
    %805 = vst.msk [vmem:[%s3 + $0x5c] sm:$0xf] %vm781, %v772
    %806 = vst.msk [vmem:[%s3 + $0x60] sm:$0xf] %vm781, %v773
    %807 = vst.msk [vmem:[%s3 + $0x64] sm:$0xf] %vm781, %v774
    %808 = vst.msk [vmem:[%s3 + $0x68] sm:$0xf] %vm781, %v775
    %809 = vst.msk [vmem:[%s3 + $0x6c] sm:$0xf] %vm781, %v776
    %810 = vst.msk [vmem:[%s3 + $0x70] sm:$0xf] %vm781, %v777
    %811 = vst.msk [vmem:[%s3 + $0x74] sm:$0xf] %vm781, %v778
    %812 = vst.msk [vmem:[%s3 + $0x78] sm:$0xf] %vm781, %v779
    %813 = vst.msk [vmem:[%s3 + $0x7c] sm:$0xf] %vm781, %v780
  $region21: #{gcn_forward.8} parent=0 // pred_fallthru
    _
  // Predicated region
  $region22: #{gcn_forward.8} parent=0 // pred_check
    _
  $region23: #{gcn_forward.8} parent=0 // pred_check_branch
    %815 = sbr.rel (0) target = $region25
  $region24: #{gcn_forward.8} parent=0 // pred_region
    _
  $region25: #{gcn_forward.8} parent=0 // pred_fallthru
    _
  // Predicated region
  $region26: #{gcn_forward.8} parent=0 // pred_check
    _
  $region27: #{gcn_forward.8} parent=0 // pred_check_branch
    %817 = sbr.rel (0) target = $region29
  $region28: #{gcn_forward.8} parent=0 // pred_region
    _
  $region29: #{gcn_forward.8} parent=0 // pred_fallthru
    _

// kernel: gcn_forward.11
$region0: #{gcn_forward.11}
  #allocation0 [shape = 'u32[]', space=smem, size = 0x4, offset = 0x4, fixed_abs, tag = 'smem constant byte address 0x4 - core index']
  #allocation1 [shape = 'u32[72,128]{1,0:T(1,128)}', space=vmem, size = 0x9000, scoped, tag = 'internal scratch']
  #allocation2 [shape = 'f32[2,32]{1,0:T(2,128)}', space=vmem, size = 0x400, scoped, tag = 'scratch operand']
  %s0 = inlined_call_operand.vmem [shape: f32[2,256], index: 0, kind: input, shape index: {}]
  %s1 = inlined_call_operand.vmem [shape: bf16[256,32], index: 1, kind: input, shape index: {}]
  %s2 = inlined_call_operand.vmem [shape: f32[32,128], index: 2, kind: input, shape index: {}]
  %s3 = inlined_call_operand.vmem [shape: f32[1,128], index: 3, kind: input, shape index: {}]
  %s4 = inlined_call_operand.hbm [shape: f32[2,128], index: 4, kind: output, shape index: {}]
  %s5 = sld [smem:[#allocation0]]
  $region34: #{gcn_forward.11} parent=0
    _
  %s7 = ssub.s32 1, %s5
  %s8 = scalar_select 0, %s7, %s5
  $region1: #{gcn_forward.11} parent=0
    #allocation3 [shape = 'u8[1024]{0}', space=vmem, size = 0x400, scoped, tag = 'output window, operand 0, single buffered']
    #allocation4 [shape = 's32[1]{0}', space=sflag, size = 0x4, scoped, tag = 'scoped memory for gcn_forward.11']
    %9 = vsyncpa [#allocation4], 0
    // Predicated region
    $region2: #{gcn_forward.11} parent=1 // pred_check
      _
    $region3: #{gcn_forward.11} parent=1 // pred_check_branch
      %11 = sbr.rel (0) target = $region5
    $region4: #{gcn_forward.11} parent=1 // pred_region
      _
    $region5: #{gcn_forward.11} parent=1 // pred_fallthru
      _
    // Predicated region
    $region6: #{gcn_forward.11} parent=1 // pred_check
      _
    $region7: #{gcn_forward.11} parent=1 // pred_check_branch
      %13 = sbr.rel (0) target = $region9
    $region8: #{gcn_forward.11} parent=1 // pred_region
      _
    $region9: #{gcn_forward.11} parent=1 // pred_fallthru
      _
    // Predicated region
    $region10: #{gcn_forward.11} parent=1 // pred_check
      _
    $region11: #{gcn_forward.11} parent=1 // pred_check_branch
      %15 = sbr.rel (0) target = $region13
    $region12: #{gcn_forward.11} parent=1 // pred_region
      _
    $region13: #{gcn_forward.11} parent=1 // pred_fallthru
      _
    // Predicated region
    $region14: #{gcn_forward.11} parent=1 // pred_check
      _
    $region15: #{gcn_forward.11} parent=1 // pred_check_branch
      %17 = sbr.rel (0) target = $region17
    $region16: #{gcn_forward.11} parent=1 // pred_region
      _
    $region17: #{gcn_forward.11} parent=1 // pred_fallthru
      _
    %p18 = scmp.eq.s32.totalorder 0, 0
    // Predicated region
    $region18: #{gcn_forward.11} parent=1 // pred_check
      %p19 = pneg %p18
    $region19: #{gcn_forward.11} parent=1 // pred_check_branch
      %21 = sbr.rel (%p19) target = $region21
    $region20: #{gcn_forward.11} parent=1 // pred_region
      %vm22 = vcmask 254976
      %23 = vst.msk [vmem:[#allocation2] sm:$0x3] %vm22, 0.0
    $region21: #{gcn_forward.11} parent=1 // pred_fallthru
      _
    %v24 = vld [vmem:[#allocation2] sm:$0x3]
    %v25 = vld [vmem:[%s0] sm:$0xf]
    %v26 = vld [vmem:[%s1] sm:$0xf]
    %v27 = vld [vmem:[%s1 + $0x4] sm:$0xf]
    %v28 = vld [vmem:[%s1 + $0x8] sm:$0xf]
    %v29 = vld [vmem:[%s1 + $0xc] sm:$0xf]
    %v30 = vld [vmem:[%s1 + $0x10] sm:$0xf]
    %v31 = vld [vmem:[%s1 + $0x14] sm:$0xf]
    %v32 = vld [vmem:[%s1 + $0x18] sm:$0xf]
    %v33 = vld [vmem:[%s1 + $0x1c] sm:$0xf]
    %v34 = vld [vmem:[%s1 + $0x20] sm:$0xf]
    %v35 = vld [vmem:[%s1 + $0x24] sm:$0xf]
    %v36 = vld [vmem:[%s1 + $0x28] sm:$0xf]
    %v37 = vld [vmem:[%s1 + $0x2c] sm:$0xf]
    %v38 = vld [vmem:[%s1 + $0x30] sm:$0xf]
    %v39 = vld [vmem:[%s1 + $0x34] sm:$0xf]
    %v40 = vld [vmem:[%s1 + $0x38] sm:$0xf]
    %v41 = vld [vmem:[%s1 + $0x3c] sm:$0xf]
    %v42 = vld [vmem:[%s1 + $0x40] sm:$0xf]
    %v43 = vld [vmem:[%s1 + $0x44] sm:$0xf]
    %v44 = vld [vmem:[%s1 + $0x48] sm:$0xf]
    %v45 = vld [vmem:[%s1 + $0x4c] sm:$0xf]
    %v46 = vld [vmem:[%s1 + $0x50] sm:$0xf]
    %v47 = vld [vmem:[%s1 + $0x54] sm:$0xf]
    %v48 = vld [vmem:[%s1 + $0x58] sm:$0xf]
    %v49 = vld [vmem:[%s1 + $0x5c] sm:$0xf]
    %v50 = vld [vmem:[%s1 + $0x60] sm:$0xf]
    %v51 = vld [vmem:[%s1 + $0x64] sm:$0xf]
    %v52 = vld [vmem:[%s1 + $0x68] sm:$0xf]
    %v53 = vld [vmem:[%s1 + $0x6c] sm:$0xf]
    %v54 = vld [vmem:[%s1 + $0x70] sm:$0xf]
    %v55 = vld [vmem:[%s1 + $0x74] sm:$0xf]
    %v56 = vld [vmem:[%s1 + $0x78] sm:$0xf]
    %v57 = vld [vmem:[%s1 + $0x7c] sm:$0xf]
    %59 = vst [vmem:[#allocation1] ss:$4 sm:$0xff] %v25
    %v60 = vld.sshfl [vmem:[#allocation1] sm:$0xff pattern:$0x73625140]
    %v61 = vld.sshfl [vmem:[#allocation1 + $0x8] sm:$0xff pattern:$0x73625140]
    %v96 = vunpack.c.l.b16 %v26
    %v97 = vunpack.c.l.b16 %v27
    %v98 = vunpack.c.l.b16 %v28
    %v99 = vunpack.c.l.b16 %v29
    %v100 = vunpack.c.l.b16 %v30
    %v101 = vunpack.c.l.b16 %v31
    %v102 = vunpack.c.l.b16 %v32
    %v103 = vunpack.c.l.b16 %v33
    %v104 = vunpack.c.l.b16 %v34
    %v105 = vunpack.c.l.b16 %v35
    %v106 = vunpack.c.l.b16 %v36
    %v107 = vunpack.c.l.b16 %v37
    %v108 = vunpack.c.l.b16 %v38
    %v109 = vunpack.c.l.b16 %v39
    %v110 = vunpack.c.l.b16 %v40
    %v111 = vunpack.c.l.b16 %v41
    %v112 = vunpack.c.l.b16 %v42
    %v113 = vunpack.c.l.b16 %v43
    %v114 = vunpack.c.l.b16 %v44
    %v115 = vunpack.c.l.b16 %v45
    %v116 = vunpack.c.l.b16 %v46
    %v117 = vunpack.c.l.b16 %v47
    %v118 = vunpack.c.l.b16 %v48
    %v119 = vunpack.c.l.b16 %v49
    %v120 = vunpack.c.l.b16 %v50
    %v121 = vunpack.c.l.b16 %v51
    %v122 = vunpack.c.l.b16 %v52
    %v123 = vunpack.c.l.b16 %v53
    %v124 = vunpack.c.l.b16 %v54
    %v125 = vunpack.c.l.b16 %v55
    %v126 = vunpack.c.l.b16 %v56
    %v127 = vunpack.c.l.b16 %v57
    %v128 = vpack.c.b16 %v97, %v96
    %v129 = vpack.c.b16 %v99, %v98
    %v130 = vpack.c.b16 %v101, %v100
    %v131 = vpack.c.b16 %v103, %v102
    %v132 = vpack.c.b16 %v105, %v104
    %v133 = vpack.c.b16 %v107, %v106
    %v134 = vpack.c.b16 %v109, %v108
    %v135 = vpack.c.b16 %v111, %v110
    %v136 = vpack.c.b16 %v113, %v112
    %v137 = vpack.c.b16 %v115, %v114
    %v138 = vpack.c.b16 %v117, %v116
    %v139 = vpack.c.b16 %v119, %v118
    %v140 = vpack.c.b16 %v121, %v120
    %v141 = vpack.c.b16 %v123, %v122
    %v142 = vpack.c.b16 %v125, %v124
    %v143 = vpack.c.b16 %v127, %v126
    %160 = vmatpush.bf16.msra.mxu0 %v135
    %161 = vmatpush.bf16.msra.mxu0 %v134
    %162 = vmatpush.bf16.msra.mxu0 %v133
    %163 = vmatpush.bf16.msra.mxu0 %v132
    %164 = vmatpush.bf16.msra.mxu0 %v131
    %165 = vmatpush.bf16.msra.mxu0 %v130
    %166 = vmatpush.bf16.msra.mxu0 %v129
    %167 = vmatpush.bf16.msra.mxu0 %v128
    %168 = vmatmul.f32.gmra.mxu0 %v60
    %v169 = vpop.f32.mrf.mxu0
    %v170 = vadd.f32 0.0, %v169
    %171 = vdwg.mxu0
    %172 = vmatpush.bf16.msra.mxu0 %v143
    %173 = vmatpush.bf16.msra.mxu0 %v142
    %174 = vmatpush.bf16.msra.mxu0 %v141
    %175 = vmatpush.bf16.msra.mxu0 %v140
    %176 = vmatpush.bf16.msra.mxu0 %v139
    %177 = vmatpush.bf16.msra.mxu0 %v138
    %178 = vmatpush.bf16.msra.mxu0 %v137
    %179 = vmatpush.bf16.msra.mxu0 %v136
    %180 = vmatmul.f32.gmra.mxu0 %v61
    %v181 = vpop.f32.mrf.mxu0
    %v182 = vadd.f32 %v170, %v181
    %183 = vdwg.mxu0
    %v184 = vadd.f32 %v24, %v182
    %vm185 = vcmask 254976
    %186 = vst.msk [vmem:[#allocation2] sm:$0x3] %vm185, %v184
    // Predicated region
    $region22: #{gcn_forward.11} parent=1 // pred_check
      %p187 = pneg %p18
    $region23: #{gcn_forward.11} parent=1 // pred_check_branch
      %189 = sbr.rel (%p187) target = $region25
    $region24: #{gcn_forward.11} parent=1 // pred_region
      %v190 = vld [vmem:[#allocation2] sm:$0x3]
      %v191 = vld [vmem:[%s2] sm:$0xff]
      %v192 = vld [vmem:[%s2 + $0x8] sm:$0xff]
      %v193 = vld [vmem:[%s2 + $0x10] sm:$0xff]
      %v194 = vld [vmem:[%s2 + $0x18] sm:$0xff]
      %v195 = vld [vmem:[%s3] sm:$0x1]
      %v197 = vperm.slane %v195, 0
      %vm199 = vcmask 261120
      %v201 = vsel %vm199, %v190, 0
      %203 = vmatpush.msra.mxu0 0.0
      %204 = vmatpush.msra.mxu0 0.0
      %205 = vmatpush.msra.mxu0 0.0
      %206 = vmatpush.msra.mxu0 0.0
      %207 = vmatpush.msra.mxu0 0.0
      %208 = vmatpush.msra.mxu0 0.0
      %209 = vmatpush.msra.mxu0 0.0
      %210 = vmatpush.msra.mxu0 0.0
      %211 = vmatpush.msra.mxu0 0.0
      %212 = vmatpush.msra.mxu0 0.0
      %213 = vmatpush.msra.mxu0 0.0
      %214 = vmatpush.msra.mxu0 0.0
      %215 = vmatpush.msra.mxu0 %v194
      %216 = vmatpush.msra.mxu0 %v193
      %217 = vmatpush.msra.mxu0 %v192
      %218 = vmatpush.msra.mxu0 %v191
      %219 = vmatmul.f32.gmra.mxu0 %v201
      %v220 = vpop.f32.mrf.mxu0
      %v221 = vadd.f32 %v197, %v220
      %222 = vdwg.mxu0
      %223 = vst [vmem:[#allocation3] sm:$0x3] %v221
    $region25: #{gcn_forward.11} parent=1 // pred_fallthru
      _
    // Predicated region
    $region26: #{gcn_forward.11} parent=1 // pred_check
      _
    $region27: #{gcn_forward.11} parent=1 // pred_check_branch
      %225 = sbr.rel (0) target = $region29
    $region28: #{gcn_forward.11} parent=1 // pred_region
      %227 = vsyncadd [#allocation4], 0
      %s229 = sshll.u32 [#allocation3], 4
      %s230 = int_to_ptr.vmem [resolvable:$true] %s229
      %s231 = sshll.u32 %s4, 4
      %s232 = int_to_ptr.hbm [resolvable:$true] %s231
      %234 = dma.vmem_to_hbm [thread:$0]  %s230, 32, %s232, [#allocation4]
    $region29: #{gcn_forward.11} parent=1 // pred_fallthru
      _
    // Predicated region
    $region30: #{gcn_forward.11} parent=1 // pred_check
      _
    $region31: #{gcn_forward.11} parent=1 // pred_check_branch
      %236 = sbr.rel (0) target = $region33
    $region32: #{gcn_forward.11} parent=1 // pred_region
      %238 = dma.done [#allocation4], 32
    $region33: #{gcn_forward.11} parent=1 // pred_fallthru
      _
    %239 = vsyncpa [#allocation4], 1

</llo_original>
